<compile_context>
chip_gen: v6e
topology: v6e:2x2x1
jax: 0.10.0
libtpu: 0.0.40
codegen_flags: <defaults>
</compile_context>

<pallas_src>
import jax
import jax.numpy as jnp
from jax.experimental import pallas as pl
from jax.experimental.pallas import tpu as pltpu

N_NODES = 32        # nodes per graph
HIDDEN = 32         # in_channels == out_channels (so self.emb is the identity)
NUM_CONV = 3        # GatedGraphConv num_layers
MLP_HDIM = 32
NUM_CLASSES = 7     # Cora-like dataset.num_classes
PAD_CLASSES = 128   # lane-dense padded class dim; wrapper slices back to NUM_CLASSES
BATCH_GRAPHS = 8    # graphs per pallas_call (grid axis, "parallel")
_NEG = -1.0e30      # padded-logit bias: exp(-1e30 - mx) == 0 exactly


def ggnn_kernel(x_ref, adj_ref, wbig_ref, bbig_ref,
                w0_ref, b0_ref, w1_ref, b1_ref, w2_ref, b2_ref,
                wout_ref, bout_ref,
                emb_ref, logp_ref):
    C = HIDDEN
    x = x_ref[0]                                   # (N, C) f32 node state
    adj16 = adj_ref[0].astype(jnp.bfloat16)        # (N, N) bf16, hoisted (loop-invariant)

    # hoist loop-invariant bias load + broadcast out of the unrolled conv loop
    bbig = jnp.broadcast_to(bbig_ref[...], (N_NODES, 4 * C))        # (N, 4C) f32

    # ---- GatedGraphConv: NUM_CONV unrolled layers, shared GRUCell --------------
    # per layer: 2 MXU ops (adj @ x and [A|x] @ Wbig[i]); gates on VPU/EUP in f32.
    for i in range(NUM_CONV):
        x16 = x.astype(jnp.bfloat16)
        a = jnp.dot(adj16, x16, preferred_element_type=jnp.float32)          # A = adj @ x
        ax16 = jnp.concatenate([a.astype(jnp.bfloat16), x16], axis=1)        # (N, 2C)
        g = jnp.dot(ax16, wbig_ref[i],
                    preferred_element_type=jnp.float32) + bbig               # (N, 4C)
        # column layout of g: [gi_r+gh_r | gi_z+gh_z | gi_n | gh_n]
        r = jax.nn.sigmoid(g[:, 0:C])
        z = jax.nn.sigmoid(g[:, C:2 * C])
        n = jnp.tanh(g[:, 2 * C:3 * C] + r * g[:, 3 * C:4 * C])
        x = (1.0 - z) * n + z * x

    # ---- MLP: (Linear -> Tanh) x 3 — bf16 dot inputs, f32 accumulate/activations
    h = jnp.tanh(jnp.dot(x.astype(jnp.bfloat16), w0_ref[...],
                         preferred_element_type=jnp.float32) + b0_ref[...])
    h = jnp.tanh(jnp.dot(h.astype(jnp.bfloat16), w1_ref[...],
                         preferred_element_type=jnp.float32) + b1_ref[...])
    h = jnp.tanh(jnp.dot(h.astype(jnp.bfloat16), w2_ref[...],
                         preferred_element_type=jnp.float32) + b2_ref[...])

    # ---- classifier head into a lane-dense 128-wide slab -----------------------
    emb = jnp.dot(h.astype(jnp.bfloat16), wout_ref[...],
                  preferred_element_type=jnp.float32) + bout_ref[...]        # (N, 128)
    emb_ref[0] = emb

    # ---- log_softmax(dim=-1): padded lanes hold -1e30 -> exp == 0, no effect ---
    mx = jnp.max(emb, axis=-1, keepdims=True)
    s = emb - mx
    lse = jnp.log(jnp.sum(jnp.exp(s), axis=-1, keepdims=True))
    logp_ref[0] = s - lse


def ggnn_forward(x, adj, params):
    B = x.shape[0]
    C, H = HIDDEN, MLP_HDIM

    per_graph = lambda b: (b, 0, 0)
    shared3 = lambda b: (0, 0, 0)
    shared2 = lambda b: (0, 0)

    in_specs = [
        pl.BlockSpec((1, N_NODES, C), per_graph),                 # x
        pl.BlockSpec((1, N_NODES, N_NODES), per_graph),           # adj
        pl.BlockSpec((NUM_CONV, 2 * C, 4 * C), shared3),          # fused gate weights
        pl.BlockSpec((1, 4 * C), shared2),                        # fused gate bias
        pl.BlockSpec((C, H), shared2), pl.BlockSpec((1, H), shared2),      # MLP 0
        pl.BlockSpec((H, H), shared2), pl.BlockSpec((1, H), shared2),      # MLP 1
        pl.BlockSpec((H, H), shared2), pl.BlockSpec((1, H), shared2),      # MLP 2
        pl.BlockSpec((H, PAD_CLASSES), shared2),                  # head weight (padded)
        pl.BlockSpec((1, PAD_CLASSES), shared2),                  # head bias (padded)
    ]
    out_specs = (pl.BlockSpec((1, N_NODES, PAD_CLASSES), per_graph),
                 pl.BlockSpec((1, N_NODES, PAD_CLASSES), per_graph))
    out_shape = (jax.ShapeDtypeStruct((B, N_NODES, PAD_CLASSES), jnp.float32),
                 jax.ShapeDtypeStruct((B, N_NODES, PAD_CLASSES), jnp.float32))

    emb_pad, logp_pad = pl.pallas_call(
        ggnn_kernel,
        grid=(B,),
        out_shape=out_shape,
        in_specs=in_specs,
        out_specs=out_specs,
        compiler_params=pltpu.CompilerParams(dimension_semantics=("parallel",)),
    )(x, adj,
      params["wbig"], params["bbig"],
      params["w0"], params["b0"], params["w1"], params["b1"],
      params["w2"], params["b2"],
      params["wout"], params["bout"])

    return emb_pad[..., :NUM_CLASSES], logp_pad[..., :NUM_CLASSES]


def make_params(key):
    C, H, K, L = HIDDEN, MLP_HDIM, NUM_CLASSES, NUM_CONV
    ks = jax.random.split(key, 16)
    u = lambda k, shape, scale: jax.random.uniform(k, shape, jnp.float32, -scale, scale)
    s_c = 1.0 / jnp.sqrt(float(C))
    s_h = 1.0 / jnp.sqrt(float(H))

    # --- raw PyTorch-layout parameters (same init scheme as before) -------------
    ggnn_w = u(ks[0], (L, C, C), s_c)            # GatedGraphConv.weight (L, C, C)
    wih = u(ks[1], (3 * C, C), s_c)              # GRUCell.weight_ih
    whh = u(ks[2], (3 * C, C), s_c)              # GRUCell.weight_hh
    bih = u(ks[3], (3 * C,), s_c)
    bhh = u(ks[4], (3 * C,), s_c)
    w0 = u(ks[5], (H, C), s_c); b0 = u(ks[6], (1, H), s_c)
    w1 = u(ks[7], (H, H), s_h); b1 = u(ks[8], (1, H), s_h)
    w2 = u(ks[9], (H, H), s_h); b2 = u(ks[10], (1, H), s_h)
    wout = u(ks[11], (K, H), s_h); bout = u(ks[12], (1, K), s_h)

    # --- host-side algebraic fusion (free at runtime) ----------------------------
    # gi = (adj @ x @ W[i]) @ Wih^T = (adj @ x) @ (W[i] @ Wih^T)
    wfused = jnp.matmul(ggnn_w, wih.T)                                     # (L, C, 3C)
    whh_t = whh.T                                                          # (C, 3C)
    # one gate matmul: [A | x] @ Wbig[i] = [gi_r+gh_r | gi_z+gh_z | gi_n | gh_n]
    top = jnp.concatenate([wfused, jnp.zeros((L, C, C), jnp.float32)], axis=2)     # (L, C, 4C)
    bot2d = jnp.concatenate([whh_t[:, :2 * C],
                             jnp.zeros((C, C), jnp.float32),
                             whh_t[:, 2 * C:]], axis=1)                            # (C, 4C)
    bot = jnp.broadcast_to(bot2d[None], (L, C, 4 * C))
    wbig = jnp.concatenate([top, bot], axis=1)                                     # (L, 2C, 4C)
    bbig = jnp.concatenate([bih[:2 * C] + bhh[:2 * C],
                            bih[2 * C:], bhh[2 * C:]])[None, :]                    # (1, 4C)

    # --- pad classifier head to a lane-dense 128-wide slab -----------------------
    wout_pad = jnp.zeros((H, PAD_CLASSES), jnp.float32).at[:, :K].set(wout.T)
    bout_pad = jnp.full((1, PAD_CLASSES), _NEG, jnp.float32).at[:, :K].set(bout)

    params = {
        "wbig": wbig.astype(jnp.bfloat16),
        "bbig": bbig.astype(jnp.float32),
        "w0": w0.T.astype(jnp.bfloat16), "b0": b0,
        "w1": w1.T.astype(jnp.bfloat16), "b1": b1,
        "w2": w2.T.astype(jnp.bfloat16), "b2": b2,
        "wout": wout_pad.astype(jnp.bfloat16), "bout": bout_pad,
    }
    return params, ks[13], ks[14]


if __name__ == "__main__":
    key = jax.random.PRNGKey(0)
    params, k_x, k_adj = make_params(key)

    B = BATCH_GRAPHS
    # node features (self.emb is the identity since in_channels == out_channels)
    x = jax.random.normal(k_x, (B, N_NODES, HIDDEN), jnp.float32)

    # synthetic directed graphs -> dense weighted adjacency, adj[b, dst, src] = w.
    # edge weights mimic T.TargetIndegree(): indegree(dst) / max_indegree.
    adj_mask = (jax.random.uniform(k_adj, (B, N_NODES, N_NODES)) < 0.15).astype(jnp.float32)
    indeg = adj_mask.sum(axis=2, keepdims=True)                      # indegree of dst
    max_indeg = jnp.maximum(indeg.max(axis=(1, 2), keepdims=True), 1.0)
    adj = adj_mask * (indeg / max_indeg)

    emb, logp = jax.jit(ggnn_forward)(x, adj, params)
    jax.block_until_ready((emb, logp))

    assert emb.shape == (B, N_NODES, NUM_CLASSES)
    assert logp.shape == (B, N_NODES, NUM_CLASSES)
    # log_softmax sanity: rows are valid log-probabilities
    assert jnp.allclose(jnp.exp(logp).sum(-1), 1.0, atol=1e-3)
    print("KERNEL_OK")
</pallas_src>

<mosaic_0001>
module attributes {stable_mosaic.version = 11 : i64} {
  func.func @ggnn_kernel(%arg0: i32, %arg1: memref<1x32x32xf32, #tpu.memory_space<vmem>>, %arg2: memref<1x32x32xf32, #tpu.memory_space<vmem>>, %arg3: memref<3x64x128xbf16, #tpu.memory_space<vmem>>, %arg4: memref<1x128xf32, #tpu.memory_space<vmem>>, %arg5: memref<32x32xbf16, #tpu.memory_space<vmem>>, %arg6: memref<1x32xf32, #tpu.memory_space<vmem>>, %arg7: memref<32x32xbf16, #tpu.memory_space<vmem>>, %arg8: memref<1x32xf32, #tpu.memory_space<vmem>>, %arg9: memref<32x32xbf16, #tpu.memory_space<vmem>>, %arg10: memref<1x32xf32, #tpu.memory_space<vmem>>, %arg11: memref<32x128xbf16, #tpu.memory_space<vmem>>, %arg12: memref<1x128xf32, #tpu.memory_space<vmem>>, %arg13: memref<1x32x128xf32, #tpu.memory_space<vmem>>, %arg14: memref<1x32x128xf32, #tpu.memory_space<vmem>>) attributes {dimension_semantics = [#tpu.dimension_semantics<parallel>], iteration_bounds = array<i64: 8>, scalar_prefetch = 0 : i64, scratch_operands = 0 : i64, tpu.core_type = #tpu.core_type<tc>, window_params = [{transform_indices = @transform_0, window_bounds = array<i64: 1, 32, 32>}, {transform_indices = @transform_1, window_bounds = array<i64: 1, 32, 32>}, {pipeline_mode = #tpu.pipeline_mode<synchronous>, transform_indices = @transform_2, window_bounds = array<i64: 3, 64, 128>}, {pipeline_mode = #tpu.pipeline_mode<synchronous>, transform_indices = @transform_3, window_bounds = array<i64: 1, 128>}, {pipeline_mode = #tpu.pipeline_mode<synchronous>, transform_indices = @transform_4, window_bounds = array<i64: 32, 32>}, {pipeline_mode = #tpu.pipeline_mode<synchronous>, transform_indices = @transform_5, window_bounds = array<i64: 1, 32>}, {pipeline_mode = #tpu.pipeline_mode<synchronous>, transform_indices = @transform_6, window_bounds = array<i64: 32, 32>}, {pipeline_mode = #tpu.pipeline_mode<synchronous>, transform_indices = @transform_7, window_bounds = array<i64: 1, 32>}, {pipeline_mode = #tpu.pipeline_mode<synchronous>, transform_indices = @transform_8, window_bounds = array<i64: 32, 32>}, {pipeline_mode = #tpu.pipeline_mode<synchronous>, transform_indices = @transform_9, window_bounds = array<i64: 1, 32>}, {pipeline_mode = #tpu.pipeline_mode<synchronous>, transform_indices = @transform_10, window_bounds = array<i64: 32, 128>}, {pipeline_mode = #tpu.pipeline_mode<synchronous>, transform_indices = @transform_11, window_bounds = array<i64: 1, 128>}, {transform_indices = @transform_12, window_bounds = array<i64: 1, 32, 128>}, {transform_indices = @transform_13, window_bounds = array<i64: 1, 32, 128>}]} {
    %c0 = arith.constant 0 : index
    %c0_0 = arith.constant 0 : index
    %c0_1 = arith.constant 0 : index
    %0 = vector.load %arg1[%c0, %c0_0, %c0_1] : memref<1x32x32xf32, #tpu.memory_space<vmem>>, vector<1x32x32xf32>
    %1 = vector.shape_cast %0 : vector<1x32x32xf32> to vector<32x32xf32>
    %c0_2 = arith.constant 0 : index
    %c0_3 = arith.constant 0 : index
    %c0_4 = arith.constant 0 : index
    %2 = vector.load %arg2[%c0_2, %c0_3, %c0_4] : memref<1x32x32xf32, #tpu.memory_space<vmem>>, vector<1x32x32xf32>
    %3 = vector.shape_cast %2 : vector<1x32x32xf32> to vector<32x32xf32>
    %4 = arith.truncf %3 : vector<32x32xf32> to vector<32x32xbf16>
    %c0_5 = arith.constant 0 : index
    %c0_6 = arith.constant 0 : index
    %5 = vector.load %arg4[%c0_5, %c0_6] : memref<1x128xf32, #tpu.memory_space<vmem>>, vector<1x128xf32>
    %6 = vector.shape_cast %5 : vector<1x128xf32> to vector<1x128xf32>
    %7 = vector.broadcast %6 : vector<1x128xf32> to vector<32x128xf32>
    %8 = arith.truncf %1 : vector<32x32xf32> to vector<32x32xbf16>
    %cst = arith.constant dense<0.000000e+00> : vector<32x32xf32>
    %9 = tpu.matmul %4, %8, %cst {dimension_numbers = #tpu.dot_dimension_numbers<[1], [0], [0], [1], [0, 0, 1, 1], [], []>} : vector<32x32xbf16>, vector<32x32xbf16>, vector<32x32xf32> -> vector<32x32xf32>
    %10 = arith.truncf %9 : vector<32x32xf32> to vector<32x32xbf16>
    %11 = tpu.concatenate %10, %8 in 1 : vector<32x32xbf16>, vector<32x32xbf16> -> vector<32x64xbf16>
    %c0_7 = arith.constant 0 : index
    %c0_8 = arith.constant 0 : index
    %c0_9 = arith.constant 0 : index
    %12 = vector.load %arg3[%c0_7, %c0_8, %c0_9] : memref<3x64x128xbf16, #tpu.memory_space<vmem>>, vector<1x64x128xbf16>
    %13 = vector.shape_cast %12 : vector<1x64x128xbf16> to vector<64x128xbf16>
    %cst_10 = arith.constant dense<0.000000e+00> : vector<32x128xf32>
    %14 = tpu.matmul %11, %13, %cst_10 {dimension_numbers = #tpu.dot_dimension_numbers<[1], [0], [0], [1], [0, 0, 1, 1], [], []>} : vector<32x64xbf16>, vector<64x128xbf16>, vector<32x128xf32> -> vector<32x128xf32>
    %15 = arith.addf %14, %7 : vector<32x128xf32>
    %16 = vector.extract_strided_slice %15 {offsets = [0, 0], sizes = [32, 32], strides = [1, 1]} : vector<32x128xf32> to vector<32x32xf32>
    %17 = arith.negf %16 : vector<32x32xf32>
    %18 = math.exp %17 : vector<32x32xf32>
    %cst_11 = arith.constant 1.000000e+00 : f32
    %19 = vector.broadcast %cst_11 : f32 to vector<32x32xf32>
    %20 = arith.addf %19, %18 : vector<32x32xf32>
    %21 = arith.divf %19, %20 : vector<32x32xf32>
    %22 = vector.extract_strided_slice %15 {offsets = [0, 32], sizes = [32, 32], strides = [1, 1]} : vector<32x128xf32> to vector<32x32xf32>
    %23 = arith.negf %22 : vector<32x32xf32>
    %24 = math.exp %23 : vector<32x32xf32>
    %cst_12 = arith.constant 1.000000e+00 : f32
    %25 = vector.broadcast %cst_12 : f32 to vector<32x32xf32>
    %26 = arith.addf %25, %24 : vector<32x32xf32>
    %27 = arith.divf %25, %26 : vector<32x32xf32>
    %28 = vector.extract_strided_slice %15 {offsets = [0, 64], sizes = [32, 32], strides = [1, 1]} : vector<32x128xf32> to vector<32x32xf32>
    %29 = vector.extract_strided_slice %15 {offsets = [0, 96], sizes = [32, 32], strides = [1, 1]} : vector<32x128xf32> to vector<32x32xf32>
    %30 = arith.mulf %21, %29 : vector<32x32xf32>
    %31 = arith.addf %28, %30 : vector<32x32xf32>
    %32 = math.tanh %31 : vector<32x32xf32>
    %cst_13 = arith.constant 1.000000e+00 : f32
    %33 = vector.broadcast %cst_13 : f32 to vector<32x32xf32>
    %34 = arith.subf %33, %27 : vector<32x32xf32>
    %35 = arith.mulf %34, %32 : vector<32x32xf32>
    %36 = arith.mulf %27, %1 : vector<32x32xf32>
    %37 = arith.addf %35, %36 : vector<32x32xf32>
    %38 = arith.truncf %37 : vector<32x32xf32> to vector<32x32xbf16>
    %cst_14 = arith.constant dense<0.000000e+00> : vector<32x32xf32>
    %39 = tpu.matmul %4, %38, %cst_14 {dimension_numbers = #tpu.dot_dimension_numbers<[1], [0], [0], [1], [0, 0, 1, 1], [], []>} : vector<32x32xbf16>, vector<32x32xbf16>, vector<32x32xf32> -> vector<32x32xf32>
    %40 = arith.truncf %39 : vector<32x32xf32> to vector<32x32xbf16>
    %41 = tpu.concatenate %40, %38 in 1 : vector<32x32xbf16>, vector<32x32xbf16> -> vector<32x64xbf16>
    %c1 = arith.constant 1 : index
    %c0_15 = arith.constant 0 : index
    %c0_16 = arith.constant 0 : index
    %42 = vector.load %arg3[%c1, %c0_15, %c0_16] : memref<3x64x128xbf16, #tpu.memory_space<vmem>>, vector<1x64x128xbf16>
    %43 = vector.shape_cast %42 : vector<1x64x128xbf16> to vector<64x128xbf16>
    %cst_17 = arith.constant dense<0.000000e+00> : vector<32x128xf32>
    %44 = tpu.matmul %41, %43, %cst_17 {dimension_numbers = #tpu.dot_dimension_numbers<[1], [0], [0], [1], [0, 0, 1, 1], [], []>} : vector<32x64xbf16>, vector<64x128xbf16>, vector<32x128xf32> -> vector<32x128xf32>
    %45 = arith.addf %44, %7 : vector<32x128xf32>
    %46 = vector.extract_strided_slice %45 {offsets = [0, 0], sizes = [32, 32], strides = [1, 1]} : vector<32x128xf32> to vector<32x32xf32>
    %47 = arith.negf %46 : vector<32x32xf32>
    %48 = math.exp %47 : vector<32x32xf32>
    %cst_18 = arith.constant 1.000000e+00 : f32
    %49 = vector.broadcast %cst_18 : f32 to vector<32x32xf32>
    %50 = arith.addf %49, %48 : vector<32x32xf32>
    %51 = arith.divf %49, %50 : vector<32x32xf32>
    %52 = vector.extract_strided_slice %45 {offsets = [0, 32], sizes = [32, 32], strides = [1, 1]} : vector<32x128xf32> to vector<32x32xf32>
    %53 = arith.negf %52 : vector<32x32xf32>
    %54 = math.exp %53 : vector<32x32xf32>
    %cst_19 = arith.constant 1.000000e+00 : f32
    %55 = vector.broadcast %cst_19 : f32 to vector<32x32xf32>
    %56 = arith.addf %55, %54 : vector<32x32xf32>
    %57 = arith.divf %55, %56 : vector<32x32xf32>
    %58 = vector.extract_strided_slice %45 {offsets = [0, 64], sizes = [32, 32], strides = [1, 1]} : vector<32x128xf32> to vector<32x32xf32>
    %59 = vector.extract_strided_slice %45 {offsets = [0, 96], sizes = [32, 32], strides = [1, 1]} : vector<32x128xf32> to vector<32x32xf32>
    %60 = arith.mulf %51, %59 : vector<32x32xf32>
    %61 = arith.addf %58, %60 : vector<32x32xf32>
    %62 = math.tanh %61 : vector<32x32xf32>
    %cst_20 = arith.constant 1.000000e+00 : f32
    %63 = vector.broadcast %cst_20 : f32 to vector<32x32xf32>
    %64 = arith.subf %63, %57 : vector<32x32xf32>
    %65 = arith.mulf %64, %62 : vector<32x32xf32>
    %66 = arith.mulf %57, %37 : vector<32x32xf32>
    %67 = arith.addf %65, %66 : vector<32x32xf32>
    %68 = arith.truncf %67 : vector<32x32xf32> to vector<32x32xbf16>
    %cst_21 = arith.constant dense<0.000000e+00> : vector<32x32xf32>
    %69 = tpu.matmul %4, %68, %cst_21 {dimension_numbers = #tpu.dot_dimension_numbers<[1], [0], [0], [1], [0, 0, 1, 1], [], []>} : vector<32x32xbf16>, vector<32x32xbf16>, vector<32x32xf32> -> vector<32x32xf32>
    %70 = arith.truncf %69 : vector<32x32xf32> to vector<32x32xbf16>
    %71 = tpu.concatenate %70, %68 in 1 : vector<32x32xbf16>, vector<32x32xbf16> -> vector<32x64xbf16>
    %c2 = arith.constant 2 : index
    %c0_22 = arith.constant 0 : index
    %c0_23 = arith.constant 0 : index
    %72 = vector.load %arg3[%c2, %c0_22, %c0_23] : memref<3x64x128xbf16, #tpu.memory_space<vmem>>, vector<1x64x128xbf16>
    %73 = vector.shape_cast %72 : vector<1x64x128xbf16> to vector<64x128xbf16>
    %cst_24 = arith.constant dense<0.000000e+00> : vector<32x128xf32>
    %74 = tpu.matmul %71, %73, %cst_24 {dimension_numbers = #tpu.dot_dimension_numbers<[1], [0], [0], [1], [0, 0, 1, 1], [], []>} : vector<32x64xbf16>, vector<64x128xbf16>, vector<32x128xf32> -> vector<32x128xf32>
    %75 = arith.addf %74, %7 : vector<32x128xf32>
    %76 = vector.extract_strided_slice %75 {offsets = [0, 0], sizes = [32, 32], strides = [1, 1]} : vector<32x128xf32> to vector<32x32xf32>
    %77 = arith.negf %76 : vector<32x32xf32>
    %78 = math.exp %77 : vector<32x32xf32>
    %cst_25 = arith.constant 1.000000e+00 : f32
    %79 = vector.broadcast %cst_25 : f32 to vector<32x32xf32>
    %80 = arith.addf %79, %78 : vector<32x32xf32>
    %81 = arith.divf %79, %80 : vector<32x32xf32>
    %82 = vector.extract_strided_slice %75 {offsets = [0, 32], sizes = [32, 32], strides = [1, 1]} : vector<32x128xf32> to vector<32x32xf32>
    %83 = arith.negf %82 : vector<32x32xf32>
    %84 = math.exp %83 : vector<32x32xf32>
    %cst_26 = arith.constant 1.000000e+00 : f32
    %85 = vector.broadcast %cst_26 : f32 to vector<32x32xf32>
    %86 = arith.addf %85, %84 : vector<32x32xf32>
    %87 = arith.divf %85, %86 : vector<32x32xf32>
    %88 = vector.extract_strided_slice %75 {offsets = [0, 64], sizes = [32, 32], strides = [1, 1]} : vector<32x128xf32> to vector<32x32xf32>
    %89 = vector.extract_strided_slice %75 {offsets = [0, 96], sizes = [32, 32], strides = [1, 1]} : vector<32x128xf32> to vector<32x32xf32>
    %90 = arith.mulf %81, %89 : vector<32x32xf32>
    %91 = arith.addf %88, %90 : vector<32x32xf32>
    %92 = math.tanh %91 : vector<32x32xf32>
    %cst_27 = arith.constant 1.000000e+00 : f32
    %93 = vector.broadcast %cst_27 : f32 to vector<32x32xf32>
    %94 = arith.subf %93, %87 : vector<32x32xf32>
    %95 = arith.mulf %94, %92 : vector<32x32xf32>
    %96 = arith.mulf %87, %67 : vector<32x32xf32>
    %97 = arith.addf %95, %96 : vector<32x32xf32>
    %98 = arith.truncf %97 : vector<32x32xf32> to vector<32x32xbf16>
    %c0_28 = arith.constant 0 : index
    %c0_29 = arith.constant 0 : index
    %99 = vector.load %arg5[%c0_28, %c0_29] : memref<32x32xbf16, #tpu.memory_space<vmem>>, vector<32x32xbf16>
    %cst_30 = arith.constant dense<0.000000e+00> : vector<32x32xf32>
    %100 = tpu.matmul %98, %99, %cst_30 {dimension_numbers = #tpu.dot_dimension_numbers<[1], [0], [0], [1], [0, 0, 1, 1], [], []>} : vector<32x32xbf16>, vector<32x32xbf16>, vector<32x32xf32> -> vector<32x32xf32>
    %c0_31 = arith.constant 0 : index
    %c0_32 = arith.constant 0 : index
    %101 = vector.load %arg6[%c0_31, %c0_32] : memref<1x32xf32, #tpu.memory_space<vmem>>, vector<1x32xf32>
    %102 = vector.broadcast %101 : vector<1x32xf32> to vector<32x32xf32>
    %103 = arith.addf %100, %102 : vector<32x32xf32>
    %104 = math.tanh %103 : vector<32x32xf32>
    %105 = arith.truncf %104 : vector<32x32xf32> to vector<32x32xbf16>
    %c0_33 = arith.constant 0 : index
    %c0_34 = arith.constant 0 : index
    %106 = vector.load %arg7[%c0_33, %c0_34] : memref<32x32xbf16, #tpu.memory_space<vmem>>, vector<32x32xbf16>
    %cst_35 = arith.constant dense<0.000000e+00> : vector<32x32xf32>
    %107 = tpu.matmul %105, %106, %cst_35 {dimension_numbers = #tpu.dot_dimension_numbers<[1], [0], [0], [1], [0, 0, 1, 1], [], []>} : vector<32x32xbf16>, vector<32x32xbf16>, vector<32x32xf32> -> vector<32x32xf32>
    %c0_36 = arith.constant 0 : index
    %c0_37 = arith.constant 0 : index
    %108 = vector.load %arg8[%c0_36, %c0_37] : memref<1x32xf32, #tpu.memory_space<vmem>>, vector<1x32xf32>
    %109 = vector.broadcast %108 : vector<1x32xf32> to vector<32x32xf32>
    %110 = arith.addf %107, %109 : vector<32x32xf32>
    %111 = math.tanh %110 : vector<32x32xf32>
    %112 = arith.truncf %111 : vector<32x32xf32> to vector<32x32xbf16>
    %c0_38 = arith.constant 0 : index
    %c0_39 = arith.constant 0 : index
    %113 = vector.load %arg9[%c0_38, %c0_39] : memref<32x32xbf16, #tpu.memory_space<vmem>>, vector<32x32xbf16>
    %cst_40 = arith.constant dense<0.000000e+00> : vector<32x32xf32>
    %114 = tpu.matmul %112, %113, %cst_40 {dimension_numbers = #tpu.dot_dimension_numbers<[1], [0], [0], [1], [0, 0, 1, 1], [], []>} : vector<32x32xbf16>, vector<32x32xbf16>, vector<32x32xf32> -> vector<32x32xf32>
    %c0_41 = arith.constant 0 : index
    %c0_42 = arith.constant 0 : index
    %115 = vector.load %arg10[%c0_41, %c0_42] : memref<1x32xf32, #tpu.memory_space<vmem>>, vector<1x32xf32>
    %116 = vector.broadcast %115 : vector<1x32xf32> to vector<32x32xf32>
    %117 = arith.addf %114, %116 : vector<32x32xf32>
    %118 = math.tanh %117 : vector<32x32xf32>
    %119 = arith.truncf %118 : vector<32x32xf32> to vector<32x32xbf16>
    %c0_43 = arith.constant 0 : index
    %c0_44 = arith.constant 0 : index
    %120 = vector.load %arg11[%c0_43, %c0_44] : memref<32x128xbf16, #tpu.memory_space<vmem>>, vector<32x128xbf16>
    %cst_45 = arith.constant dense<0.000000e+00> : vector<32x128xf32>
    %121 = tpu.matmul %119, %120, %cst_45 {dimension_numbers = #tpu.dot_dimension_numbers<[1], [0], [0], [1], [0, 0, 1, 1], [], []>} : vector<32x32xbf16>, vector<32x128xbf16>, vector<32x128xf32> -> vector<32x128xf32>
    %c0_46 = arith.constant 0 : index
    %c0_47 = arith.constant 0 : index
    %122 = vector.load %arg12[%c0_46, %c0_47] : memref<1x128xf32, #tpu.memory_space<vmem>>, vector<1x128xf32>
    %123 = vector.broadcast %122 : vector<1x128xf32> to vector<32x128xf32>
    %124 = arith.addf %121, %123 : vector<32x128xf32>
    %c0_48 = arith.constant 0 : index
    %c0_49 = arith.constant 0 : index
    %c0_50 = arith.constant 0 : index
    %125 = vector.load %arg13[%c0_48, %c0_49, %c0_50] : memref<1x32x128xf32, #tpu.memory_space<vmem>>, vector<1x32x128xf32>
    %126 = vector.shape_cast %125 : vector<1x32x128xf32> to vector<32x128xf32>
    %127 = vector.shape_cast %124 : vector<32x128xf32> to vector<1x32x128xf32>
    tpu.vector_store %arg13[%c0_48, %c0_49, %c0_50], %127 {strides = array<i32>} : memref<1x32x128xf32, #tpu.memory_space<vmem>>, vector<1x32x128xf32>,
    %cst_51 = arith.constant dense<0xFF800000> : vector<32xf32>
    %128 = vector.multi_reduction <maximumf>, %124, %cst_51 [1] : vector<32x128xf32> to vector<32xf32>
    %129 = vector.shape_cast %128 : vector<32xf32> to vector<32x1xf32>
    %130 = vector.broadcast %129 : vector<32x1xf32> to vector<32x128xf32>
    %131 = arith.subf %124, %130 : vector<32x128xf32>
    %132 = math.exp %131 : vector<32x128xf32>
    %cst_52 = arith.constant dense<0.000000e+00> : vector<32xf32>
    %133 = vector.multi_reduction <add>, %132, %cst_52 [1] : vector<32x128xf32> to vector<32xf32>
    %134 = vector.shape_cast %133 : vector<32xf32> to vector<32x1xf32>
    %135 = math.log %134 : vector<32x1xf32>
    %136 = vector.broadcast %135 : vector<32x1xf32> to vector<32x128xf32>
    %137 = arith.subf %131, %136 : vector<32x128xf32>
    %c0_53 = arith.constant 0 : index
    %c0_54 = arith.constant 0 : index
    %c0_55 = arith.constant 0 : index
    %138 = vector.load %arg14[%c0_53, %c0_54, %c0_55] : memref<1x32x128xf32, #tpu.memory_space<vmem>>, vector<1x32x128xf32>
    %139 = vector.shape_cast %138 : vector<1x32x128xf32> to vector<32x128xf32>
    %140 = vector.shape_cast %137 : vector<32x128xf32> to vector<1x32x128xf32>
    tpu.vector_store %arg14[%c0_53, %c0_54, %c0_55], %140 {strides = array<i32>} : memref<1x32x128xf32, #tpu.memory_space<vmem>>, vector<1x32x128xf32>,
    return
  }
  func.func @transform_0(%arg0: i32) -> (i32, i32, i32) {
    %c0_i32 = arith.constant 0 : i32
    %c0_i32_0 = arith.constant 0 : i32
    %c0_i32_1 = arith.constant 0 : i32
    return %arg0, %c0_i32, %c0_i32_0 : i32, i32, i32
  }
  func.func @transform_1(%arg0: i32) -> (i32, i32, i32) {
    %c0_i32 = arith.constant 0 : i32
    %c0_i32_0 = arith.constant 0 : i32
    %c0_i32_1 = arith.constant 0 : i32
    return %arg0, %c0_i32, %c0_i32_0 : i32, i32, i32
  }
  func.func @transform_2(%arg0: i32) -> (i32, i32, i32) {
    %c0_i32 = arith.constant 0 : i32
    %c0_i32_0 = arith.constant 0 : i32
    %c0_i32_1 = arith.constant 0 : i32
    %c0_i32_2 = arith.constant 0 : i32
    return %c0_i32, %c0_i32_0, %c0_i32_1 : i32, i32, i32
  }
  func.func @transform_3(%arg0: i32) -> (i32, i32) {
    %c0_i32 = arith.constant 0 : i32
    %c0_i32_0 = arith.constant 0 : i32
    %c0_i32_1 = arith.constant 0 : i32
    return %c0_i32, %c0_i32_0 : i32, i32
  }
  func.func @transform_4(%arg0: i32) -> (i32, i32) {
    %c0_i32 = arith.constant 0 : i32
    %c0_i32_0 = arith.constant 0 : i32
    %c0_i32_1 = arith.constant 0 : i32
    return %c0_i32, %c0_i32_0 : i32, i32
  }
  func.func @transform_5(%arg0: i32) -> (i32, i32) {
    %c0_i32 = arith.constant 0 : i32
    %c0_i32_0 = arith.constant 0 : i32
    %c0_i32_1 = arith.constant 0 : i32
    return %c0_i32, %c0_i32_0 : i32, i32
  }
  func.func @transform_6(%arg0: i32) -> (i32, i32) {
    %c0_i32 = arith.constant 0 : i32
    %c0_i32_0 = arith.constant 0 : i32
    %c0_i32_1 = arith.constant 0 : i32
    return %c0_i32, %c0_i32_0 : i32, i32
  }
  func.func @transform_7(%arg0: i32) -> (i32, i32) {
    %c0_i32 = arith.constant 0 : i32
    %c0_i32_0 = arith.constant 0 : i32
    %c0_i32_1 = arith.constant 0 : i32
    return %c0_i32, %c0_i32_0 : i32, i32
  }
  func.func @transform_8(%arg0: i32) -> (i32, i32) {
    %c0_i32 = arith.constant 0 : i32
    %c0_i32_0 = arith.constant 0 : i32
    %c0_i32_1 = arith.constant 0 : i32
    return %c0_i32, %c0_i32_0 : i32, i32
  }
  func.func @transform_9(%arg0: i32) -> (i32, i32) {
    %c0_i32 = arith.constant 0 : i32
    %c0_i32_0 = arith.constant 0 : i32
    %c0_i32_1 = arith.constant 0 : i32
    return %c0_i32, %c0_i32_0 : i32, i32
  }
  func.func @transform_10(%arg0: i32) -> (i32, i32) {
    %c0_i32 = arith.constant 0 : i32
    %c0_i32_0 = arith.constant 0 : i32
    %c0_i32_1 = arith.constant 0 : i32
    return %c0_i32, %c0_i32_0 : i32, i32
  }
  func.func @transform_11(%arg0: i32) -> (i32, i32) {
    %c0_i32 = arith.constant 0 : i32
    %c0_i32_0 = arith.constant 0 : i32
    %c0_i32_1 = arith.constant 0 : i32
    return %c0_i32, %c0_i32_0 : i32, i32
  }
  func.func @transform_12(%arg0: i32) -> (i32, i32, i32) {
    %c0_i32 = arith.constant 0 : i32
    %c0_i32_0 = arith.constant 0 : i32
    %c0_i32_1 = arith.constant 0 : i32
    return %arg0, %c0_i32, %c0_i32_0 : i32, i32, i32
  }
  func.func @transform_13(%arg0: i32) -> (i32, i32, i32) {
    %c0_i32 = arith.constant 0 : i32
    %c0_i32_0 = arith.constant 0 : i32
    %c0_i32_1 = arith.constant 0 : i32
    return %arg0, %c0_i32, %c0_i32_0 : i32, i32, i32
  }
}

</mosaic_0001>

<llo_original>
// kernel: ggnn_forward.1
$region0: #{ggnn_forward.1}
  #allocation0 [shape = 'u32[]', space=smem, size = 0x4, offset = 0x4, fixed_abs, tag = 'smem constant byte address 0x4 - core index']
  #allocation1 [shape = 'u32[144,128]{1,0:T(1,128)}', space=vmem, size = 0x12000, scoped, tag = 'internal scratch']
  %s0 = inlined_call_operand.hbm [shape: f32[8,32,32], index: 0, kind: input, shape index: {}]
  %s1 = inlined_call_operand.hbm [shape: f32[8,32,32], index: 1, kind: input, shape index: {}]
  %s2 = inlined_call_operand.hbm [shape: bf16[3,64,128], index: 2, kind: input, shape index: {}]
  %s3 = inlined_call_operand.hbm [shape: f32[1,128], index: 3, kind: input, shape index: {}]
  %s4 = inlined_call_operand.hbm [shape: bf16[32,32], index: 4, kind: input, shape index: {}]
  %s5 = inlined_call_operand.hbm [shape: f32[1,32], index: 5, kind: input, shape index: {}]
  %s6 = inlined_call_operand.hbm [shape: bf16[32,32], index: 6, kind: input, shape index: {}]
  %s7 = inlined_call_operand.hbm [shape: f32[1,32], index: 7, kind: input, shape index: {}]
  %s8 = inlined_call_operand.vmem [shape: bf16[32,32], index: 8, kind: input, shape index: {}]
  %s9 = inlined_call_operand.hbm [shape: f32[1,32], index: 9, kind: input, shape index: {}]
  %s10 = inlined_call_operand.hbm [shape: bf16[32,128], index: 10, kind: input, shape index: {}]
  %s11 = inlined_call_operand.hbm [shape: f32[1,128], index: 11, kind: input, shape index: {}]
  %s12 = inlined_call_operand.vmem [shape: f32[8,32,128], index: 12, kind: output, shape index: {0}]
  %s13 = inlined_call_operand.vmem [shape: f32[8,32,128], index: 13, kind: output, shape index: {1}]
  %14 = xla_tuple %s12, %s13
  %s15 = sld [smem:[#allocation0]]
  $region133: #{ggnn_forward.1} parent=0
    _
  %s17 = ssub.s32 1, %s15
  %s18 = scalar_select 0, %s17, %s15
  $region1: #{ggnn_forward.1} parent=0
    #allocation2 [shape = 'u8[32768]{0}', space=vmem, size = 0x8000, scoped, tag = 'input window, operand 0']
    #allocation3 [shape = 's32[2]{0}', space=sflag, size = 0x8, scoped, tag = 'scoped memory for ggnn_forward.1']
    #allocation4 [shape = 'u8[32768]{0}', space=vmem, size = 0x8000, scoped, tag = 'input window, operand 1']
    #allocation5 [shape = 's32[2]{0}', space=sflag, size = 0x8, scoped, tag = 'scoped memory for ggnn_forward.1']
    #allocation6 [shape = 'u8[49152]{0}', space=vmem, size = 0xc000, scoped, tag = 'input window, operand 2, single buffered']
    #allocation7 [shape = 'u8[512]{0}', space=vmem, size = 0x400, scoped, tag = 'input window, operand 3, single buffered']
    #allocation8 [shape = 's32[1]{0}', space=sflag, size = 0x4, scoped, tag = 'scoped memory for ggnn_forward.1']
    #allocation9 [shape = 'u8[8192]{0}', space=vmem, size = 0x2000, scoped, tag = 'input window, operand 4, single buffered']
    #allocation10 [shape = 'u8[512]{0}', space=vmem, size = 0x400, scoped, tag = 'input window, operand 5, single buffered']
    #allocation11 [shape = 's32[1]{0}', space=sflag, size = 0x4, scoped, tag = 'scoped memory for ggnn_forward.1']
    #allocation12 [shape = 'u8[8192]{0}', space=vmem, size = 0x2000, scoped, tag = 'input window, operand 6, single buffered']
    #allocation13 [shape = 'u8[512]{0}', space=vmem, size = 0x400, scoped, tag = 'input window, operand 7, single buffered']
    #allocation14 [shape = 's32[1]{0}', space=sflag, size = 0x4, scoped, tag = 'scoped memory for ggnn_forward.1']
    #allocation15 [shape = 'u8[512]{0}', space=vmem, size = 0x400, scoped, tag = 'input window, operand 9, single buffered']
    #allocation16 [shape = 'u8[8192]{0}', space=vmem, size = 0x2000, scoped, tag = 'input window, operand 10, single buffered']
    #allocation17 [shape = 's32[1]{0}', space=sflag, size = 0x4, scoped, tag = 'scoped memory for ggnn_forward.1']
    #allocation18 [shape = 'u8[512]{0}', space=vmem, size = 0x400, scoped, tag = 'input window, operand 11, single buffered']
    %19 = vsyncpa [#allocation3], 0
    %s20 = scalar_lea.sflag [#allocation3], 1
    %21 = vsyncpa %s20, 0
    %22 = vsyncpa [#allocation5], 0
    %s23 = scalar_lea.sflag [#allocation5], 1
    %24 = vsyncpa %s23, 0
    %25 = vsyncpa [#allocation8], 0
    %26 = vsyncpa [#allocation11], 0
    %27 = vsyncpa [#allocation14], 0
    %28 = vsyncpa [#allocation17], 0
    loop: start=0, step=1, limit=10
    $region2: #{ggnn_forward.1} parent=1 // loop_pre_header
      _
    $region3: #{ggnn_forward.1} parent=1 // loop_header
      %s30 = sphi 0, %s34
      %p31 = scmp.ge.s32.totalorder %s30, 10
      %s40 = sphi 0, %s42
      %s43 = sphi 0, %s40
      %s44 = sphi 0, %s43
      %s60 = sphi 0, %s44
      %s66 = sphi 0, %s68
      %s69 = sphi 0, %s66
      %s70 = sphi 0, %s69
      %s86 = sphi 0, %s70
      %s90 = sphi 0, %s90
      %s92 = sphi 0, %s90
      %s93 = sphi 0, %s92
      %s107 = sphi 0, %s93
      %s111 = sphi 0, %s111
      %s113 = sphi 0, %s111
      %s114 = sphi 0, %s113
      %s128 = sphi 0, %s114
      %s132 = sphi 0, %s132
      %s134 = sphi 0, %s132
      %s135 = sphi 0, %s134
      %s149 = sphi 0, %s135
      %s153 = sphi 0, %s153
      %s155 = sphi 0, %s153
      %s156 = sphi 0, %s155
      %s170 = sphi 0, %s156
      %s174 = sphi 0, %s174
      %s176 = sphi 0, %s174
      %s177 = sphi 0, %s176
      %s191 = sphi 0, %s177
      %s195 = sphi 0, %s195
      %s197 = sphi 0, %s195
      %s198 = sphi 0, %s197
      %s212 = sphi 0, %s198
      %s216 = sphi 0, %s216
      %s218 = sphi 0, %s216
      %s219 = sphi 0, %s218
      %s233 = sphi 0, %s219
      %s237 = sphi 0, %s237
      %s239 = sphi 0, %s237
      %s240 = sphi 0, %s239
      %s254 = sphi 0, %s240
      %s258 = sphi 0, %s258
      %s260 = sphi 0, %s258
      %s261 = sphi 0, %s260
      %s275 = sphi 0, %s261
      %s279 = sphi 0, %s279
      %s281 = sphi 0, %s279
      %s282 = sphi 0, %s281
      %s296 = sphi 0, %s282
      %s302 = sphi 0, %s304
      %s305 = sphi 0, %s302
      %s306 = sphi 0, %s305
      %s322 = sphi 0, %s306
      %s328 = sphi 0, %s330
      %s331 = sphi 0, %s328
      %s332 = sphi 0, %s331
      %s348 = sphi 0, %s332
    $region4: #{ggnn_forward.1} parent=1 // loop_header_branch
      %33 = sbr.rel (%p31) target = $region8
    $region5: #{ggnn_forward.1} parent=1 // loop_body
      %s35 = ssub.s32 %s30, 1
      %s36 = ssub.s32 %s30, 2
      %s37 = sadd.s32 %s30, 1
      %s38 = ssub.s32 %s30, %s37
      %p39 = scmp.eq.s32.totalorder %s38, 0
      %s41 = sadd.s32 %s40, 1
      %s42 = scalar_select %p39, %s40, %s41
      %p45 = pneg %p39
      %p46 = scmp.eq.s32.totalorder %s30, 7
      %p47 = por %p45, %p46
      %p48 = scmp.ne.s32.totalorder %s40, %s43
      %p49 = scmp.eq.s32.totalorder %s30, 0
      %p50 = por %p48, %p49
      %p51 = scmp.ne.s32.totalorder %s40, %s43
      %p52 = scmp.eq.s32.totalorder %s35, 7
      %p53 = por %p51, %p52
      %p54 = scmp.ne.s32.totalorder %s43, %s44
      %p55 = scmp.eq.s32.totalorder %s35, 0
      %p56 = por %p54, %p55
      %p57 = scmp.ne.s32.totalorder %s43, %s44
      %p58 = scmp.eq.s32.totalorder %s36, 7
      %p59 = por %p57, %p58
      %p61 = scmp.ne.s32.totalorder %s44, %s60
      %p62 = scmp.eq.s32.totalorder %s36, 0
      %p63 = por %p61, %p62
      %s64 = ssub.s32 %s30, %s37
      %p65 = scmp.eq.s32.totalorder %s64, 0
      %s67 = sadd.s32 %s66, 1
      %s68 = scalar_select %p65, %s66, %s67
      %p71 = pneg %p65
      %p72 = scmp.eq.s32.totalorder %s30, 7
      %p73 = por %p71, %p72
      %p74 = scmp.ne.s32.totalorder %s66, %s69
      %p75 = scmp.eq.s32.totalorder %s30, 0
      %p76 = por %p74, %p75
      %p77 = scmp.ne.s32.totalorder %s66, %s69
      %p78 = scmp.eq.s32.totalorder %s35, 7
      %p79 = por %p77, %p78
      %p80 = scmp.ne.s32.totalorder %s69, %s70
      %p81 = scmp.eq.s32.totalorder %s35, 0
      %p82 = por %p80, %p81
      %p83 = scmp.ne.s32.totalorder %s69, %s70
      %p84 = scmp.eq.s32.totalorder %s36, 7
      %p85 = por %p83, %p84
      %p87 = scmp.ne.s32.totalorder %s70, %s86
      %p88 = scmp.eq.s32.totalorder %s36, 0
      %p89 = por %p87, %p88
      %s91 = sadd.s32 %s90, 1
      %p94 = scmp.eq.s32.totalorder %s30, 7
      %p95 = scmp.ne.s32.totalorder %s90, %s92
      %p96 = scmp.eq.s32.totalorder %s30, 0
      %p97 = por %p95, %p96
      %p98 = scmp.ne.s32.totalorder %s90, %s92
      %p99 = scmp.eq.s32.totalorder %s35, 7
      %p100 = por %p98, %p99
      %p101 = scmp.ne.s32.totalorder %s92, %s93
      %p102 = scmp.eq.s32.totalorder %s35, 0
      %p103 = por %p101, %p102
      %p104 = scmp.ne.s32.totalorder %s92, %s93
      %p105 = scmp.eq.s32.totalorder %s36, 7
      %p106 = por %p104, %p105
      %p108 = scmp.ne.s32.totalorder %s93, %s107
      %p109 = scmp.eq.s32.totalorder %s36, 0
      %p110 = por %p108, %p109
      %s112 = sadd.s32 %s111, 1
      %p115 = scmp.eq.s32.totalorder %s30, 7
      %p116 = scmp.ne.s32.totalorder %s111, %s113
      %p117 = scmp.eq.s32.totalorder %s30, 0
      %p118 = por %p116, %p117
      %p119 = scmp.ne.s32.totalorder %s111, %s113
      %p120 = scmp.eq.s32.totalorder %s35, 7
      %p121 = por %p119, %p120
      %p122 = scmp.ne.s32.totalorder %s113, %s114
      %p123 = scmp.eq.s32.totalorder %s35, 0
      %p124 = por %p122, %p123
      %p125 = scmp.ne.s32.totalorder %s113, %s114
      %p126 = scmp.eq.s32.totalorder %s36, 7
      %p127 = por %p125, %p126
      %p129 = scmp.ne.s32.totalorder %s114, %s128
      %p130 = scmp.eq.s32.totalorder %s36, 0
      %p131 = por %p129, %p130
      %s133 = sadd.s32 %s132, 1
      %p136 = scmp.eq.s32.totalorder %s30, 7
      %p137 = scmp.ne.s32.totalorder %s132, %s134
      %p138 = scmp.eq.s32.totalorder %s30, 0
      %p139 = por %p137, %p138
      %p140 = scmp.ne.s32.totalorder %s132, %s134
      %p141 = scmp.eq.s32.totalorder %s35, 7
      %p142 = por %p140, %p141
      %p143 = scmp.ne.s32.totalorder %s134, %s135
      %p144 = scmp.eq.s32.totalorder %s35, 0
      %p145 = por %p143, %p144
      %p146 = scmp.ne.s32.totalorder %s134, %s135
      %p147 = scmp.eq.s32.totalorder %s36, 7
      %p148 = por %p146, %p147
      %p150 = scmp.ne.s32.totalorder %s135, %s149
      %p151 = scmp.eq.s32.totalorder %s36, 0
      %p152 = por %p150, %p151
      %s154 = sadd.s32 %s153, 1
      %p157 = scmp.eq.s32.totalorder %s30, 7
      %p158 = scmp.ne.s32.totalorder %s153, %s155
      %p159 = scmp.eq.s32.totalorder %s30, 0
      %p160 = por %p158, %p159
      %p161 = scmp.ne.s32.totalorder %s153, %s155
      %p162 = scmp.eq.s32.totalorder %s35, 7
      %p163 = por %p161, %p162
      %p164 = scmp.ne.s32.totalorder %s155, %s156
      %p165 = scmp.eq.s32.totalorder %s35, 0
      %p166 = por %p164, %p165
      %p167 = scmp.ne.s32.totalorder %s155, %s156
      %p168 = scmp.eq.s32.totalorder %s36, 7
      %p169 = por %p167, %p168
      %p171 = scmp.ne.s32.totalorder %s156, %s170
      %p172 = scmp.eq.s32.totalorder %s36, 0
      %p173 = por %p171, %p172
      %s175 = sadd.s32 %s174, 1
      %p178 = scmp.eq.s32.totalorder %s30, 7
      %p179 = scmp.ne.s32.totalorder %s174, %s176
      %p180 = scmp.eq.s32.totalorder %s30, 0
      %p181 = por %p179, %p180
      %p182 = scmp.ne.s32.totalorder %s174, %s176
      %p183 = scmp.eq.s32.totalorder %s35, 7
      %p184 = por %p182, %p183
      %p185 = scmp.ne.s32.totalorder %s176, %s177
      %p186 = scmp.eq.s32.totalorder %s35, 0
      %p187 = por %p185, %p186
      %p188 = scmp.ne.s32.totalorder %s176, %s177
      %p189 = scmp.eq.s32.totalorder %s36, 7
      %p190 = por %p188, %p189
      %p192 = scmp.ne.s32.totalorder %s177, %s191
      %p193 = scmp.eq.s32.totalorder %s36, 0
      %p194 = por %p192, %p193
      %s196 = sadd.s32 %s195, 1
      %p199 = scmp.eq.s32.totalorder %s30, 7
      %p200 = scmp.ne.s32.totalorder %s195, %s197
      %p201 = scmp.eq.s32.totalorder %s30, 0
      %p202 = por %p200, %p201
      %p203 = scmp.ne.s32.totalorder %s195, %s197
      %p204 = scmp.eq.s32.totalorder %s35, 7
      %p205 = por %p203, %p204
      %p206 = scmp.ne.s32.totalorder %s197, %s198
      %p207 = scmp.eq.s32.totalorder %s35, 0
      %p208 = por %p206, %p207
      %p209 = scmp.ne.s32.totalorder %s197, %s198
      %p210 = scmp.eq.s32.totalorder %s36, 7
      %p211 = por %p209, %p210
      %p213 = scmp.ne.s32.totalorder %s198, %s212
      %p214 = scmp.eq.s32.totalorder %s36, 0
      %p215 = por %p213, %p214
      %s217 = sadd.s32 %s216, 1
      %p220 = scmp.eq.s32.totalorder %s30, 7
      %p221 = scmp.ne.s32.totalorder %s216, %s218
      %p222 = scmp.eq.s32.totalorder %s30, 0
      %p223 = por %p221, %p222
      %p224 = scmp.ne.s32.totalorder %s216, %s218
      %p225 = scmp.eq.s32.totalorder %s35, 7
      %p226 = por %p224, %p225
      %p227 = scmp.ne.s32.totalorder %s218, %s219
      %p228 = scmp.eq.s32.totalorder %s35, 0
      %p229 = por %p227, %p228
      %p230 = scmp.ne.s32.totalorder %s218, %s219
      %p231 = scmp.eq.s32.totalorder %s36, 7
      %p232 = por %p230, %p231
      %p234 = scmp.ne.s32.totalorder %s219, %s233
      %p235 = scmp.eq.s32.totalorder %s36, 0
      %p236 = por %p234, %p235
      %s238 = sadd.s32 %s237, 1
      %p241 = scmp.eq.s32.totalorder %s30, 7
      %p242 = scmp.ne.s32.totalorder %s237, %s239
      %p243 = scmp.eq.s32.totalorder %s30, 0
      %p244 = por %p242, %p243
      %p245 = scmp.ne.s32.totalorder %s237, %s239
      %p246 = scmp.eq.s32.totalorder %s35, 7
      %p247 = por %p245, %p246
      %p248 = scmp.ne.s32.totalorder %s239, %s240
      %p249 = scmp.eq.s32.totalorder %s35, 0
      %p250 = por %p248, %p249
      %p251 = scmp.ne.s32.totalorder %s239, %s240
      %p252 = scmp.eq.s32.totalorder %s36, 7
      %p253 = por %p251, %p252
      %p255 = scmp.ne.s32.totalorder %s240, %s254
      %p256 = scmp.eq.s32.totalorder %s36, 0
      %p257 = por %p255, %p256
      %s259 = sadd.s32 %s258, 1
      %p262 = scmp.eq.s32.totalorder %s30, 7
      %p263 = scmp.ne.s32.totalorder %s258, %s260
      %p264 = scmp.eq.s32.totalorder %s30, 0
      %p265 = por %p263, %p264
      %p266 = scmp.ne.s32.totalorder %s258, %s260
      %p267 = scmp.eq.s32.totalorder %s35, 7
      %p268 = por %p266, %p267
      %p269 = scmp.ne.s32.totalorder %s260, %s261
      %p270 = scmp.eq.s32.totalorder %s35, 0
      %p271 = por %p269, %p270
      %p272 = scmp.ne.s32.totalorder %s260, %s261
      %p273 = scmp.eq.s32.totalorder %s36, 7
      %p274 = por %p272, %p273
      %p276 = scmp.ne.s32.totalorder %s261, %s275
      %p277 = scmp.eq.s32.totalorder %s36, 0
      %p278 = por %p276, %p277
      %s280 = sadd.s32 %s279, 1
      %p283 = scmp.eq.s32.totalorder %s30, 7
      %p284 = scmp.ne.s32.totalorder %s279, %s281
      %p285 = scmp.eq.s32.totalorder %s30, 0
      %p286 = por %p284, %p285
      %p287 = scmp.ne.s32.totalorder %s279, %s281
      %p288 = scmp.eq.s32.totalorder %s35, 7
      %p289 = por %p287, %p288
      %p290 = scmp.ne.s32.totalorder %s281, %s282
      %p291 = scmp.eq.s32.totalorder %s35, 0
      %p292 = por %p290, %p291
      %p293 = scmp.ne.s32.totalorder %s281, %s282
      %p294 = scmp.eq.s32.totalorder %s36, 7
      %p295 = por %p293, %p294
      %p297 = scmp.ne.s32.totalorder %s282, %s296
      %p298 = scmp.eq.s32.totalorder %s36, 0
      %p299 = por %p297, %p298
      %s300 = ssub.s32 %s30, %s37
      %p301 = scmp.eq.s32.totalorder %s300, 0
      %s303 = sadd.s32 %s302, 1
      %s304 = scalar_select %p301, %s302, %s303
      %p307 = pneg %p301
      %p308 = scmp.eq.s32.totalorder %s30, 7
      %p309 = por %p307, %p308
      %p310 = scmp.ne.s32.totalorder %s302, %s305
      %p311 = scmp.eq.s32.totalorder %s30, 0
      %p312 = por %p310, %p311
      %p313 = scmp.ne.s32.totalorder %s302, %s305
      %p314 = scmp.eq.s32.totalorder %s35, 7
      %p315 = por %p313, %p314
      %p316 = scmp.ne.s32.totalorder %s305, %s306
      %p317 = scmp.eq.s32.totalorder %s35, 0
      %p318 = por %p316, %p317
      %p319 = scmp.ne.s32.totalorder %s305, %s306
      %p320 = scmp.eq.s32.totalorder %s36, 7
      %p321 = por %p319, %p320
      %p323 = scmp.ne.s32.totalorder %s306, %s322
      %p324 = scmp.eq.s32.totalorder %s36, 0
      %p325 = por %p323, %p324
      %s326 = ssub.s32 %s30, %s37
      %p327 = scmp.eq.s32.totalorder %s326, 0
      %s329 = sadd.s32 %s328, 1
      %s330 = scalar_select %p327, %s328, %s329
      %p333 = pneg %p327
      %p334 = scmp.eq.s32.totalorder %s30, 7
      %p335 = por %p333, %p334
      %p336 = scmp.ne.s32.totalorder %s328, %s331
      %p337 = scmp.eq.s32.totalorder %s30, 0
      %p338 = por %p336, %p337
      %p339 = scmp.ne.s32.totalorder %s328, %s331
      %p340 = scmp.eq.s32.totalorder %s35, 7
      %p341 = por %p339, %p340
      %p342 = scmp.ne.s32.totalorder %s331, %s332
      %p343 = scmp.eq.s32.totalorder %s35, 0
      %p344 = por %p342, %p343
      %p345 = scmp.ne.s32.totalorder %s331, %s332
      %p346 = scmp.eq.s32.totalorder %s36, 7
      %p347 = por %p345, %p346
      %p349 = scmp.ne.s32.totalorder %s332, %s348
      %p350 = scmp.eq.s32.totalorder %s36, 0
      %p351 = por %p349, %p350
      %p352 = scmp.le.s32.totalorder 1, %s30
      %p353 = scmp.lt.s32.totalorder %s30, 9
      %p354 = pnand %p352, %p353
      %p355 = pneg %p354
      // Predicated region
      $region9: #{ggnn_forward.1} parent=5 // pred_check
        _
      $region10: #{ggnn_forward.1} parent=5 // pred_check_branch
        %357 = sbr.rel (%p354) target = $region12
      $region11: #{ggnn_forward.1} parent=5 // pred_region
        %s358 = ssub.s32 %s30, 1
        // Predicated region
        $region13: #{ggnn_forward.1} parent=11 // pred_check
          %p359 = pneg %p103
        $region14: #{ggnn_forward.1} parent=11 // pred_check_branch
          %361 = sbr.rel (%p359) target = $region16
        $region15: #{ggnn_forward.1} parent=11 // pred_region
          %s363 = ssub.s32 1536, 1536
          %364 = vsyncadd [#allocation5], %s363
          %s365 = sshll.u32 [#allocation6], 4
          %s366 = int_to_ptr.vmem [resolvable:$true] %s365
          %371 = dma.hbm_to_vmem [thread:$0]  %s2, 1536, %s366, [#allocation5], 64, 64, 4
        $region16: #{ggnn_forward.1} parent=11 // pred_fallthru
          _
        // Predicated region
        $region17: #{ggnn_forward.1} parent=11 // pred_check
          %p372 = pneg %p124
        $region18: #{ggnn_forward.1} parent=11 // pred_check_branch
          %374 = sbr.rel (%p372) target = $region20
        $region19: #{ggnn_forward.1} parent=11 // pred_region
          %s376 = ssub.s32 16, 16
          %377 = vsyncadd [#allocation8], %s376
          %s379 = sshll.u32 [#allocation7], 4
          %s380 = int_to_ptr.vmem [resolvable:$true] %s379
          %382 = dma.hbm_to_vmem [thread:$0]  %s3, 16, %s380, [#allocation8]
        $region20: #{ggnn_forward.1} parent=11 // pred_fallthru
          _
        // Predicated region
        $region21: #{ggnn_forward.1} parent=11 // pred_check
          %p383 = pneg %p145
        $region22: #{ggnn_forward.1} parent=11 // pred_check_branch
          %385 = sbr.rel (%p383) target = $region24
        $region23: #{ggnn_forward.1} parent=11 // pred_region
          %s387 = ssub.s32 256, 256
          %388 = vsyncadd [#allocation8], %s387
          %s389 = sshll.u32 [#allocation9], 4
          %s390 = int_to_ptr.vmem [resolvable:$true] %s389
          %395 = dma.hbm_to_vmem [thread:$0]  %s4, 256, %s390, [#allocation8], 64, 64, 4
        $region24: #{ggnn_forward.1} parent=11 // pred_fallthru
          _
        // Predicated region
        $region25: #{ggnn_forward.1} parent=11 // pred_check
          %p396 = pneg %p166
        $region26: #{ggnn_forward.1} parent=11 // pred_check_branch
          %398 = sbr.rel (%p396) target = $region28
        $region27: #{ggnn_forward.1} parent=11 // pred_region
          %s400 = ssub.s32 16, 16
          %401 = vsyncadd [#allocation11], %s400
          %s403 = sshll.u32 [#allocation10], 4
          %s404 = int_to_ptr.vmem [resolvable:$true] %s403
          %406 = dma.hbm_to_vmem [thread:$0]  %s5, 16, %s404, [#allocation11]
        $region28: #{ggnn_forward.1} parent=11 // pred_fallthru
          _
        // Predicated region
        $region29: #{ggnn_forward.1} parent=11 // pred_check
          %p407 = pneg %p187
        $region30: #{ggnn_forward.1} parent=11 // pred_check_branch
          %409 = sbr.rel (%p407) target = $region32
        $region31: #{ggnn_forward.1} parent=11 // pred_region
          %s411 = ssub.s32 256, 256
          %412 = vsyncadd [#allocation11], %s411
          %s413 = sshll.u32 [#allocation12], 4
          %s414 = int_to_ptr.vmem [resolvable:$true] %s413
          %419 = dma.hbm_to_vmem [thread:$0]  %s6, 256, %s414, [#allocation11], 64, 64, 4
        $region32: #{ggnn_forward.1} parent=11 // pred_fallthru
          _
        // Predicated region
        $region33: #{ggnn_forward.1} parent=11 // pred_check
          %p420 = pneg %p208
        $region34: #{ggnn_forward.1} parent=11 // pred_check_branch
          %422 = sbr.rel (%p420) target = $region36
        $region35: #{ggnn_forward.1} parent=11 // pred_region
          %s424 = ssub.s32 16, 16
          %425 = vsyncadd [#allocation14], %s424
          %s427 = sshll.u32 [#allocation13], 4
          %s428 = int_to_ptr.vmem [resolvable:$true] %s427
          %430 = dma.hbm_to_vmem [thread:$0]  %s7, 16, %s428, [#allocation14]
        $region36: #{ggnn_forward.1} parent=11 // pred_fallthru
          _
        // Predicated region
        $region37: #{ggnn_forward.1} parent=11 // pred_check
          %p431 = pneg %p229
        $region38: #{ggnn_forward.1} parent=11 // pred_check_branch
          %433 = sbr.rel (%p431) target = $region40
        $region39: #{ggnn_forward.1} parent=11 // pred_region
          _
        $region40: #{ggnn_forward.1} parent=11 // pred_fallthru
          _
        // Predicated region
        $region41: #{ggnn_forward.1} parent=11 // pred_check
          %p434 = pneg %p250
        $region42: #{ggnn_forward.1} parent=11 // pred_check_branch
          %436 = sbr.rel (%p434) target = $region44
        $region43: #{ggnn_forward.1} parent=11 // pred_region
          %s438 = ssub.s32 16, 16
          %439 = vsyncadd [#allocation14], %s438
          %s441 = sshll.u32 [#allocation15], 4
          %s442 = int_to_ptr.vmem [resolvable:$true] %s441
          %444 = dma.hbm_to_vmem [thread:$0]  %s9, 16, %s442, [#allocation14]
        $region44: #{ggnn_forward.1} parent=11 // pred_fallthru
          _
        // Predicated region
        $region45: #{ggnn_forward.1} parent=11 // pred_check
          %p445 = pneg %p271
        $region46: #{ggnn_forward.1} parent=11 // pred_check_branch
          %447 = sbr.rel (%p445) target = $region48
        $region47: #{ggnn_forward.1} parent=11 // pred_region
          %s449 = ssub.s32 256, 256
          %450 = vsyncadd [#allocation17], %s449
          %s451 = sshll.u32 [#allocation16], 4
          %s452 = int_to_ptr.vmem [resolvable:$true] %s451
          %457 = dma.hbm_to_vmem [thread:$0]  %s10, 256, %s452, [#allocation17], 64, 64, 4
        $region48: #{ggnn_forward.1} parent=11 // pred_fallthru
          _
        // Predicated region
        $region49: #{ggnn_forward.1} parent=11 // pred_check
          %p458 = pneg %p292
        $region50: #{ggnn_forward.1} parent=11 // pred_check_branch
          %460 = sbr.rel (%p458) target = $region52
        $region51: #{ggnn_forward.1} parent=11 // pred_region
          %s462 = ssub.s32 16, 16
          %463 = vsyncadd [#allocation17], %s462
          %s465 = sshll.u32 [#allocation18], 4
          %s466 = int_to_ptr.vmem [resolvable:$true] %s465
          %468 = dma.hbm_to_vmem [thread:$0]  %s11, 16, %s466, [#allocation17]
        $region52: #{ggnn_forward.1} parent=11 // pred_fallthru
          _
      $region12: #{ggnn_forward.1} parent=5 // pred_fallthru
        _
      %p469 = scmp.lt.s32.totalorder %s30, 8
      // Predicated region
      $region53: #{ggnn_forward.1} parent=5 // pred_check
        %p470 = pneg %p469
      $region54: #{ggnn_forward.1} parent=5 // pred_check_branch
        %472 = sbr.rel (%p470) target = $region56
      $region55: #{ggnn_forward.1} parent=5 // pred_region
        // Predicated region
        $region57: #{ggnn_forward.1} parent=55 // pred_check
          %p473 = pneg %p50
        $region58: #{ggnn_forward.1} parent=55 // pred_check_branch
          %475 = sbr.rel (%p473) target = $region60
        $region59: #{ggnn_forward.1} parent=55 // pred_region
          %s476 = sand.u32 %s40, 1
          %s477 = scalar_lea.sflag [#allocation3], %s476
          %s478 = sand.u32 %s40, 1
          %s479 = smul.addr %s478, 32
          %s480 = scalar_lea.vmem [#allocation2], %s479
          %s482 = ssub.s32 512, 512
          %483 = vsyncadd %s477, %s482
          %s484 = smul.addr %s30, 4
          %s485 = smul.addr %s484, 128
          %s486 = scalar_lea.hbm %s0, %s485
          %s487 = sshll.u32 %s480, 4
          %s488 = int_to_ptr.vmem [resolvable:$true] %s487
          %493 = dma.hbm_to_vmem [thread:$0]  %s486, 512, %s488, %s477, 128, 128, 8
        $region60: #{ggnn_forward.1} parent=55 // pred_fallthru
          _
        // Predicated region
        $region61: #{ggnn_forward.1} parent=55 // pred_check
          %p494 = pneg %p76
        $region62: #{ggnn_forward.1} parent=55 // pred_check_branch
          %496 = sbr.rel (%p494) target = $region64
        $region63: #{ggnn_forward.1} parent=55 // pred_region
          %s497 = sand.u32 %s30, 1
          %s498 = scalar_lea.sflag [#allocation5], %s497
          %s499 = sand.u32 %s66, 1
          %s500 = smul.addr %s499, 32
          %s501 = scalar_lea.vmem [#allocation4], %s500
          %s503 = ssub.s32 512, 512
          %504 = vsyncadd %s498, %s503
          %s505 = smul.addr %s30, 4
          %s506 = smul.addr %s505, 128
          %s507 = scalar_lea.hbm %s1, %s506
          %s508 = sshll.u32 %s501, 4
          %s509 = int_to_ptr.vmem [resolvable:$true] %s508
          %514 = dma.hbm_to_vmem [thread:$0]  %s507, 512, %s509, %s498, 128, 128, 8
        $region64: #{ggnn_forward.1} parent=55 // pred_fallthru
          _
      $region56: #{ggnn_forward.1} parent=5 // pred_fallthru
        _
      %p515 = scmp.le.s32.totalorder 1, %s30
      %p516 = scmp.lt.s32.totalorder %s30, 9
      %p517 = pnand %p515, %p516
      %p518 = pneg %p517
      // Predicated region
      $region65: #{ggnn_forward.1} parent=5 // pred_check
        _
      $region66: #{ggnn_forward.1} parent=5 // pred_check_branch
        %520 = sbr.rel (%p517) target = $region68
      $region67: #{ggnn_forward.1} parent=5 // pred_region
        %s521 = ssub.s32 %s30, 1
        %s522 = sand.u32 %s43, 1
        %s523 = scalar_lea.sflag [#allocation3], %s522
        %s524 = sand.u32 %s43, 1
        %s525 = smul.addr %s524, 32
        %s526 = scalar_lea.vmem [#allocation2], %s525
        // Predicated region
        $region69: #{ggnn_forward.1} parent=67 // pred_check
          %p527 = pneg %p56
        $region70: #{ggnn_forward.1} parent=67 // pred_check_branch
          %529 = sbr.rel (%p527) target = $region72
        $region71: #{ggnn_forward.1} parent=67 // pred_region
          %530 = dma.done %s523, 512
        $region72: #{ggnn_forward.1} parent=67 // pred_fallthru
          _
        %s531 = sand.u32 %s35, 1
        %s532 = scalar_lea.sflag [#allocation5], %s531
        %s533 = sand.u32 %s69, 1
        %s534 = smul.addr %s533, 32
        %s535 = scalar_lea.vmem [#allocation4], %s534
        // Predicated region
        $region73: #{ggnn_forward.1} parent=67 // pred_check
          %p536 = pneg %p82
        $region74: #{ggnn_forward.1} parent=67 // pred_check_branch
          %538 = sbr.rel (%p536) target = $region76
        $region75: #{ggnn_forward.1} parent=67 // pred_region
          %539 = dma.done %s532, 512
        $region76: #{ggnn_forward.1} parent=67 // pred_fallthru
          _
        // Predicated region
        $region77: #{ggnn_forward.1} parent=67 // pred_check
          %p540 = pneg %p103
        $region78: #{ggnn_forward.1} parent=67 // pred_check_branch
          %542 = sbr.rel (%p540) target = $region80
        $region79: #{ggnn_forward.1} parent=67 // pred_region
          %543 = dma.done [#allocation5], 1536
        $region80: #{ggnn_forward.1} parent=67 // pred_fallthru
          _
        // Predicated region
        $region81: #{ggnn_forward.1} parent=67 // pred_check
          %p544 = pneg %p124
        $region82: #{ggnn_forward.1} parent=67 // pred_check_branch
          %546 = sbr.rel (%p544) target = $region84
        $region83: #{ggnn_forward.1} parent=67 // pred_region
          %547 = dma.done [#allocation8], 16
        $region84: #{ggnn_forward.1} parent=67 // pred_fallthru
          _
        // Predicated region
        $region85: #{ggnn_forward.1} parent=67 // pred_check
          %p548 = pneg %p145
        $region86: #{ggnn_forward.1} parent=67 // pred_check_branch
          %550 = sbr.rel (%p548) target = $region88
        $region87: #{ggnn_forward.1} parent=67 // pred_region
          %551 = dma.done [#allocation8], 256
        $region88: #{ggnn_forward.1} parent=67 // pred_fallthru
          _
        // Predicated region
        $region89: #{ggnn_forward.1} parent=67 // pred_check
          %p552 = pneg %p166
        $region90: #{ggnn_forward.1} parent=67 // pred_check_branch
          %554 = sbr.rel (%p552) target = $region92
        $region91: #{ggnn_forward.1} parent=67 // pred_region
          %555 = dma.done [#allocation11], 16
        $region92: #{ggnn_forward.1} parent=67 // pred_fallthru
          _
        // Predicated region
        $region93: #{ggnn_forward.1} parent=67 // pred_check
          %p556 = pneg %p187
        $region94: #{ggnn_forward.1} parent=67 // pred_check_branch
          %558 = sbr.rel (%p556) target = $region96
        $region95: #{ggnn_forward.1} parent=67 // pred_region
          %559 = dma.done [#allocation11], 256
        $region96: #{ggnn_forward.1} parent=67 // pred_fallthru
          _
        // Predicated region
        $region97: #{ggnn_forward.1} parent=67 // pred_check
          %p560 = pneg %p208
        $region98: #{ggnn_forward.1} parent=67 // pred_check_branch
          %562 = sbr.rel (%p560) target = $region100
        $region99: #{ggnn_forward.1} parent=67 // pred_region
          %563 = dma.done [#allocation14], 16
        $region100: #{ggnn_forward.1} parent=67 // pred_fallthru
          _
        // Predicated region
        $region101: #{ggnn_forward.1} parent=67 // pred_check
          %p564 = pneg %p250
        $region102: #{ggnn_forward.1} parent=67 // pred_check_branch
          %566 = sbr.rel (%p564) target = $region104
        $region103: #{ggnn_forward.1} parent=67 // pred_region
          %567 = dma.done [#allocation14], 16
        $region104: #{ggnn_forward.1} parent=67 // pred_fallthru
          _
        // Predicated region
        $region105: #{ggnn_forward.1} parent=67 // pred_check
          %p568 = pneg %p271
        $region106: #{ggnn_forward.1} parent=67 // pred_check_branch
          %570 = sbr.rel (%p568) target = $region108
        $region107: #{ggnn_forward.1} parent=67 // pred_region
          %571 = dma.done [#allocation17], 256
        $region108: #{ggnn_forward.1} parent=67 // pred_fallthru
          _
        // Predicated region
        $region109: #{ggnn_forward.1} parent=67 // pred_check
          %p572 = pneg %p292
        $region110: #{ggnn_forward.1} parent=67 // pred_check_branch
          %574 = sbr.rel (%p572) target = $region112
        $region111: #{ggnn_forward.1} parent=67 // pred_region
          %575 = dma.done [#allocation17], 16
        $region112: #{ggnn_forward.1} parent=67 // pred_fallthru
          _
        %s576 = sand.u32 %s43, 1
        %s577 = scalar_lea.sflag [#allocation3], %s576
        %s578 = sand.u32 %s43, 1
        %s579 = smul.addr %s578, 32
        %s580 = scalar_lea.vmem [#allocation2], %s579
        %p581 = pneg %p56
        %p582 = pneg %p53
        %s583 = sand.u32 %s35, 1
        %s584 = scalar_lea.sflag [#allocation5], %s583
        %s585 = sand.u32 %s69, 1
        %s586 = smul.addr %s585, 32
        %s587 = scalar_lea.vmem [#allocation4], %s586
        %p588 = pneg %p82
        %p589 = pneg %p79
        %p590 = pneg %p103
        %p591 = pneg %p100
        %p592 = pneg %p124
        %p593 = pneg %p121
        %p594 = pneg %p145
        %p595 = pneg %p142
        %p596 = pneg %p166
        %p597 = pneg %p163
        %p598 = pneg %p187
        %p599 = pneg %p184
        %p600 = pneg %p208
        %p601 = pneg %p205
        %p602 = pneg %p229
        %p603 = pneg %p226
        %p604 = pneg %p250
        %p605 = pneg %p247
        %p606 = pneg %p271
        %p607 = pneg %p268
        %p608 = pneg %p292
        %p609 = pneg %p289
        %p610 = pneg %p318
        %p611 = pneg %p315
        %p612 = scmp.lt.s32.totalorder %s35, 7
        %s613 = scalar_select %p612, %s35, 7
        %s614 = smul.addr %s613, 4
        %s615 = smul.addr %s614, 8
        %s616 = scalar_lea.vmem %s12, %s615
        %p617 = pneg %p344
        %p618 = pneg %p341
        %p619 = scmp.lt.s32.totalorder %s35, 7
        %s620 = scalar_select %p619, %s35, 7
        %s621 = smul.addr %s620, 4
        %s622 = smul.addr %s621, 8
        %s623 = scalar_lea.vmem %s13, %s622
        %p624 = scmp.lt.s32.totalorder %s35, 7
        %s625 = scalar_select %p624, %s35, 7
        %s626 = smul.addr %s625, 4
        %s627 = smul.addr %s626, 8
        %s628 = scalar_lea.vmem %s12, %s627
        %p629 = scmp.lt.s32.totalorder %s35, 7
        %s630 = scalar_select %p629, %s35, 7
        %s631 = smul.addr %s630, 4
        %s632 = smul.addr %s631, 8
        %s633 = scalar_lea.vmem %s13, %s632
        %v635 = vld [vmem:[%s526] sm:$0xff]
        %v636 = vld [vmem:[%s526 + $0x8] sm:$0xff]
        %v637 = vld [vmem:[%s526 + $0x10] sm:$0xff]
        %v638 = vld [vmem:[%s526 + $0x18] sm:$0xff]
        %v639 = vld [vmem:[%s535] sm:$0xff]
        %v640 = vld [vmem:[%s535 + $0x8] sm:$0xff]
        %v641 = vld [vmem:[%s535 + $0x10] sm:$0xff]
        %v642 = vld [vmem:[%s535 + $0x18] sm:$0xff]
        %v643 = vpack.c.bf16 %v640, %v639
        %v644 = vpack.c.bf16 %v642, %v641
        %v645 = vld [vmem:[#allocation7] sm:$0x1]
        %v647 = vlaneseq
        %v648 = vshrl.u32 %v647, 7
        %v649 = vsub.s32 0, %v648
        %v650 = vrot.slane %v645, %v649
        %v652 = vpack.c.bf16 %v636, %v635
        %v653 = vpack.c.bf16 %v638, %v637
        %vm654 = vcmask 261120
        %v656 = vsel %vm654, %v643, 0
        %v659 = vsel %vm654, %v644, 0
        %661 = vmatprep.subr.bf16.mxu0 0
        %662 = vmatpush1.bf16.msra.mxu0 0
        %663 = vmatprep.subr.bf16.mxu0 0
        %664 = vmatpush1.bf16.msra.mxu0 0
        %665 = vmatprep.subr.bf16.mxu0 0
        %666 = vmatpush1.bf16.msra.mxu0 0
        %667 = vmatprep.subr.bf16.mxu0 0
        %668 = vmatpush1.bf16.msra.mxu0 0
        %669 = vmatprep.subr.bf16.mxu0 0
        %670 = vmatpush1.bf16.msra.mxu0 0
        %671 = vmatprep.subr.bf16.mxu0 0
        %672 = vmatpush1.bf16.msra.mxu0 0
        %673 = vmatprep.subr.bf16.mxu0 0
        %674 = vmatpush1.bf16.msra.mxu0 %v653
        %675 = vmatprep.subr.bf16.mxu0 0
        %676 = vmatpush1.bf16.msra.mxu0 %v652
        %677 = vmatprep.subr.bf16.mxu0 0
        %678 = vmatpush2.bf16.msra.mxu0 0
        %679 = vmatprep.subr.bf16.mxu0 0
        %680 = vmatpush2.bf16.msra.mxu0 0
        %681 = vmatprep.subr.bf16.mxu0 0
        %682 = vmatpush2.bf16.msra.mxu0 0
        %683 = vmatprep.subr.bf16.mxu0 0
        %684 = vmatpush2.bf16.msra.mxu0 0
        %685 = vmatprep.subr.bf16.mxu0 0
        %686 = vmatpush2.bf16.msra.mxu0 0
        %687 = vmatprep.subr.bf16.mxu0 0
        %688 = vmatpush2.bf16.msra.mxu0 0
        %689 = vmatprep.subr.bf16.mxu0 0
        %690 = vmatpush2.bf16.msra.mxu0 0
        %691 = vmatprep.subr.bf16.mxu0 0
        %692 = vmatpush2.bf16.msra.mxu0 0
        %693 = vmatprep.mubr.bf16.mxu0 0
        %694 = vmatmul.mubr.bf16.gmra.mxu0 %v656
        %v695 = vpop.f32.mrf.mxu0
        %v696 = vadd.f32 0.0, %v695
        %v697 = vpop.f32.mrf.mxu0
        %v698 = vpop.f32.mrf.mxu0
        %v699 = vadd.f32 0.0, %v698
        %v700 = vpop.f32.mrf.mxu0
        %701 = vmatprep.mubr.bf16.mxu0 0
        %702 = vmatmul.mubr.bf16.gmra.mxu0 %v659
        %v703 = vpop.f32.mrf.mxu0
        %v704 = vadd.f32 0.0, %v703
        %v705 = vpop.f32.mrf.mxu0
        %v706 = vpop.f32.mrf.mxu0
        %v707 = vadd.f32 0.0, %v706
        %v708 = vpop.f32.mrf.mxu0
        %709 = vdwg.mxu0
        %v710 = vpack.c.bf16 %v699, %v696
        %v711 = vpack.c.bf16 %v707, %v704
        %714 = vrot.lane.b32.xlu0 %v652, 32
        %v715 = vpop.permute.xlu0 %714
        %716 = vrot.lane.b32.xlu0 %v653, 32
        %v717 = vpop.permute.xlu0 %716
        %v720 = vsel %vm654, %v710, %v715
        %v723 = vsel %vm654, %v711, %v717
        %v724 = vld [vmem:[#allocation6] sm:$0xf]
        %v725 = vld [vmem:[#allocation6 + $0x4] sm:$0xf]
        %v726 = vld [vmem:[#allocation6 + $0x8] sm:$0xf]
        %v727 = vld [vmem:[#allocation6 + $0xc] sm:$0xf]
        %v728 = vld [vmem:[#allocation6 + $0x10] sm:$0xf]
        %v729 = vld [vmem:[#allocation6 + $0x14] sm:$0xf]
        %v730 = vld [vmem:[#allocation6 + $0x18] sm:$0xf]
        %v731 = vld [vmem:[#allocation6 + $0x1c] sm:$0xf]
        %v740 = vunpack.c.l.b16 %v724
        %v741 = vunpack.c.l.b16 %v725
        %v742 = vunpack.c.l.b16 %v726
        %v743 = vunpack.c.l.b16 %v727
        %v744 = vunpack.c.l.b16 %v728
        %v745 = vunpack.c.l.b16 %v729
        %v746 = vunpack.c.l.b16 %v730
        %v747 = vunpack.c.l.b16 %v731
        %v748 = vpack.c.b16 %v741, %v740
        %v749 = vpack.c.b16 %v743, %v742
        %v750 = vpack.c.b16 %v745, %v744
        %v751 = vpack.c.b16 %v747, %v746
        %vm756 = vcmask 523264
        %v757 = vsel %vm756, %v720, 0
        %v759 = vsel %vm756, %v723, 0
        %761 = vmatprep.subr.bf16.mxu0 0
        %762 = vmatpush1.bf16.msra.mxu0 0
        %763 = vmatprep.subr.bf16.mxu0 0
        %764 = vmatpush1.bf16.msra.mxu0 0
        %765 = vmatprep.subr.bf16.mxu0 0
        %766 = vmatpush1.bf16.msra.mxu0 0
        %767 = vmatprep.subr.bf16.mxu0 0
        %768 = vmatpush1.bf16.msra.mxu0 0
        %769 = vmatprep.subr.bf16.mxu0 0
        %770 = vmatpush1.bf16.msra.mxu0 %v751
        %771 = vmatprep.subr.bf16.mxu0 0
        %772 = vmatpush1.bf16.msra.mxu0 %v750
        %773 = vmatprep.subr.bf16.mxu0 0
        %774 = vmatpush1.bf16.msra.mxu0 %v749
        %775 = vmatprep.subr.bf16.mxu0 0
        %776 = vmatpush1.bf16.msra.mxu0 %v748
        %777 = vmatprep.subr.bf16.mxu0 0
        %778 = vmatpush2.bf16.msra.mxu0 0
        %779 = vmatprep.subr.bf16.mxu0 0
        %780 = vmatpush2.bf16.msra.mxu0 0
        %781 = vmatprep.subr.bf16.mxu0 0
        %782 = vmatpush2.bf16.msra.mxu0 0
        %783 = vmatprep.subr.bf16.mxu0 0
        %784 = vmatpush2.bf16.msra.mxu0 0
        %785 = vmatprep.subr.bf16.mxu0 0
        %786 = vmatpush2.bf16.msra.mxu0 0
        %787 = vmatprep.subr.bf16.mxu0 0
        %788 = vmatpush2.bf16.msra.mxu0 0
        %789 = vmatprep.subr.bf16.mxu0 0
        %790 = vmatpush2.bf16.msra.mxu0 0
        %791 = vmatprep.subr.bf16.mxu0 0
        %792 = vmatpush2.bf16.msra.mxu0 0
        %793 = vmatprep.mubr.bf16.mxu0 0
        %794 = vmatmul.mubr.bf16.gmra.mxu0 %v757
        %v795 = vpop.f32.mrf.mxu0
        %v796 = vadd.f32 %v650, %v795
        %v797 = vpop.f32.mrf.mxu0
        %v798 = vpop.f32.mrf.mxu0
        %v799 = vadd.f32 %v650, %v798
        %v800 = vpop.f32.mrf.mxu0
        %801 = vmatprep.mubr.bf16.mxu0 0
        %802 = vmatmul.mubr.bf16.gmra.mxu0 %v759
        %v803 = vpop.f32.mrf.mxu0
        %v804 = vadd.f32 %v650, %v803
        %v805 = vpop.f32.mrf.mxu0
        %v806 = vpop.f32.mrf.mxu0
        %v807 = vadd.f32 %v650, %v806
        %v808 = vpop.f32.mrf.mxu0
        %809 = vdwg.mxu0
        %v810 = vxor.u32 %v796, 2147483648
        %v811 = vxor.u32 %v799, 2147483648
        %v812 = vxor.u32 %v804, 2147483648
        %v813 = vxor.u32 %v807, 2147483648
        %v814 = vmul.f32 %v810, 1.442695
        %v815 = vpow.pop %v814
        %v816 = vmul.f32 %v811, 1.442695
        %v817 = vpow.pop %v816
        %v818 = vmul.f32 %v812, 1.442695
        %v819 = vpow.pop %v818
        %v820 = vmul.f32 %v813, 1.442695
        %v821 = vpow.pop %v820
        %v822 = vadd.f32 %v815, 1.0
        %v823 = vadd.f32 %v817, 1.0
        %v824 = vadd.f32 %v819, 1.0
        %v825 = vadd.f32 %v821, 1.0
        %v826 = vrcp.pop %v822
        %v827 = vmul.f32 1.0, %v826
        %v828 = vrcp.pop %v823
        %v829 = vmul.f32 1.0, %v828
        %v830 = vrcp.pop %v824
        %v831 = vmul.f32 1.0, %v830
        %v832 = vrcp.pop %v825
        %v833 = vmul.f32 1.0, %v832
        %838 = vrot.lane.b32.xlu0 %v796, 32
        %v839 = vpop.permute.xlu0 %838
        %840 = vrot.lane.b32.xlu0 %v799, 32
        %v841 = vpop.permute.xlu0 %840
        %842 = vrot.lane.b32.xlu0 %v804, 32
        %v843 = vpop.permute.xlu0 %842
        %844 = vrot.lane.b32.xlu0 %v807, 32
        %v845 = vpop.permute.xlu0 %844
        %v850 = vmul.f32 %v827, %v839
        %v851 = vmul.f32 %v829, %v841
        %v852 = vmul.f32 %v831, %v843
        %v853 = vmul.f32 %v833, %v845
        %858 = vrot.lane.b32.xlu0 %v850, 64
        %v859 = vpop.permute.xlu0 %858
        %860 = vrot.lane.b32.xlu0 %v851, 64
        %v861 = vpop.permute.xlu0 %860
        %862 = vrot.lane.b32.xlu0 %v852, 64
        %v863 = vpop.permute.xlu0 %862
        %864 = vrot.lane.b32.xlu0 %v853, 64
        %v865 = vpop.permute.xlu0 %864
        %v870 = vadd.f32 %v796, %v859
        %v871 = vadd.f32 %v799, %v861
        %v872 = vadd.f32 %v804, %v863
        %v873 = vadd.f32 %v807, %v865
        %v874 = vtanh.pop %v870
        %v875 = vtanh.pop %v871
        %v876 = vtanh.pop %v872
        %v877 = vtanh.pop %v873
        %v878 = vsub.f32 1.0, %v827
        %v879 = vsub.f32 1.0, %v829
        %v880 = vsub.f32 1.0, %v831
        %v881 = vsub.f32 1.0, %v833
        %886 = vrot.lane.b32.xlu0 %v874, 96
        %v887 = vpop.permute.xlu0 %886
        %888 = vrot.lane.b32.xlu0 %v875, 96
        %v889 = vpop.permute.xlu0 %888
        %890 = vrot.lane.b32.xlu0 %v876, 96
        %v891 = vpop.permute.xlu0 %890
        %892 = vrot.lane.b32.xlu0 %v877, 96
        %v893 = vpop.permute.xlu0 %892
        %v898 = vmul.f32 %v878, %v887
        %v899 = vmul.f32 %v879, %v889
        %v900 = vmul.f32 %v880, %v891
        %v901 = vmul.f32 %v881, %v893
        %906 = vrot.lane.b32.xlu0 %v635, 32
        %v907 = vpop.permute.xlu0 %906
        %908 = vrot.lane.b32.xlu0 %v636, 32
        %v909 = vpop.permute.xlu0 %908
        %910 = vrot.lane.b32.xlu0 %v637, 32
        %v911 = vpop.permute.xlu0 %910
        %912 = vrot.lane.b32.xlu0 %v638, 32
        %v913 = vpop.permute.xlu0 %912
        %v918 = vmul.f32 %v827, %v907
        %v919 = vmul.f32 %v829, %v909
        %v920 = vmul.f32 %v831, %v911
        %v921 = vmul.f32 %v833, %v913
        %v922 = vadd.f32 %v898, %v918
        %v923 = vadd.f32 %v899, %v919
        %v924 = vadd.f32 %v900, %v920
        %v925 = vadd.f32 %v901, %v921
        %v926 = vpack.c.bf16 %v923, %v922
        %v927 = vpack.c.bf16 %v925, %v924
        %930 = vrot.lane.b32.xlu0 %v926, 96
        %v931 = vpop.permute.xlu0 %930
        %932 = vrot.lane.b32.xlu0 %v927, 96
        %v933 = vpop.permute.xlu0 %932
        %936 = vmatprep.subr.bf16.mxu0 0
        %937 = vmatpush1.bf16.msra.mxu0 0
        %938 = vmatprep.subr.bf16.mxu0 0
        %939 = vmatpush1.bf16.msra.mxu0 0
        %940 = vmatprep.subr.bf16.mxu0 0
        %941 = vmatpush1.bf16.msra.mxu0 0
        %942 = vmatprep.subr.bf16.mxu0 0
        %943 = vmatpush1.bf16.msra.mxu0 0
        %944 = vmatprep.subr.bf16.mxu0 0
        %945 = vmatpush1.bf16.msra.mxu0 0
        %946 = vmatprep.subr.bf16.mxu0 0
        %947 = vmatpush1.bf16.msra.mxu0 0
        %948 = vmatprep.subr.bf16.mxu0 0
        %949 = vmatpush1.bf16.msra.mxu0 %v933
        %950 = vmatprep.subr.bf16.mxu0 0
        %951 = vmatpush1.bf16.msra.mxu0 %v931
        %952 = vmatprep.subr.bf16.mxu0 0
        %953 = vmatpush2.bf16.msra.mxu0 0
        %954 = vmatprep.subr.bf16.mxu0 0
        %955 = vmatpush2.bf16.msra.mxu0 0
        %956 = vmatprep.subr.bf16.mxu0 0
        %957 = vmatpush2.bf16.msra.mxu0 0
        %958 = vmatprep.subr.bf16.mxu0 0
        %959 = vmatpush2.bf16.msra.mxu0 0
        %960 = vmatprep.subr.bf16.mxu0 0
        %961 = vmatpush2.bf16.msra.mxu0 0
        %962 = vmatprep.subr.bf16.mxu0 0
        %963 = vmatpush2.bf16.msra.mxu0 0
        %964 = vmatprep.subr.bf16.mxu0 0
        %965 = vmatpush2.bf16.msra.mxu0 0
        %966 = vmatprep.subr.bf16.mxu0 0
        %967 = vmatpush2.bf16.msra.mxu0 0
        %968 = vmatprep.mubr.bf16.mxu0 0
        %969 = vmatmul.mubr.bf16.gmra.mxu0 %v656
        %v970 = vpop.f32.mrf.mxu0
        %v971 = vadd.f32 0.0, %v970
        %v972 = vpop.f32.mrf.mxu0
        %v973 = vpop.f32.mrf.mxu0
        %v974 = vadd.f32 0.0, %v973
        %v975 = vpop.f32.mrf.mxu0
        %976 = vmatprep.mubr.bf16.mxu0 0
        %977 = vmatmul.mubr.bf16.gmra.mxu0 %v659
        %v978 = vpop.f32.mrf.mxu0
        %v979 = vadd.f32 0.0, %v978
        %v980 = vpop.f32.mrf.mxu0
        %v981 = vpop.f32.mrf.mxu0
        %v982 = vadd.f32 0.0, %v981
        %v983 = vpop.f32.mrf.mxu0
        %984 = vdwg.mxu0
        %v985 = vpack.c.bf16 %v974, %v971
        %v986 = vpack.c.bf16 %v982, %v979
        %v989 = vsel %vm654, %v985, %v926
        %v992 = vsel %vm654, %v986, %v927
        %s993 = scalar_lea.vmem [#allocation6], 32
        %v994 = vld [vmem:[%s993] sm:$0xf]
        %v995 = vld [vmem:[%s993 + $0x4] sm:$0xf]
        %v996 = vld [vmem:[%s993 + $0x8] sm:$0xf]
        %v997 = vld [vmem:[%s993 + $0xc] sm:$0xf]
        %v998 = vld [vmem:[%s993 + $0x10] sm:$0xf]
        %v999 = vld [vmem:[%s993 + $0x14] sm:$0xf]
        %v1000 = vld [vmem:[%s993 + $0x18] sm:$0xf]
        %v1001 = vld [vmem:[%s993 + $0x1c] sm:$0xf]
        %v1010 = vunpack.c.l.b16 %v994
        %v1011 = vunpack.c.l.b16 %v995
        %v1012 = vunpack.c.l.b16 %v996
        %v1013 = vunpack.c.l.b16 %v997
        %v1014 = vunpack.c.l.b16 %v998
        %v1015 = vunpack.c.l.b16 %v999
        %v1016 = vunpack.c.l.b16 %v1000
        %v1017 = vunpack.c.l.b16 %v1001
        %v1018 = vpack.c.b16 %v1011, %v1010
        %v1019 = vpack.c.b16 %v1013, %v1012
        %v1020 = vpack.c.b16 %v1015, %v1014
        %v1021 = vpack.c.b16 %v1017, %v1016
        %v1026 = vsel %vm756, %v989, 0
        %v1028 = vsel %vm756, %v992, 0
        %1030 = vmatprep.subr.bf16.mxu0 0
        %1031 = vmatpush1.bf16.msra.mxu0 0
        %1032 = vmatprep.subr.bf16.mxu0 0
        %1033 = vmatpush1.bf16.msra.mxu0 0
        %1034 = vmatprep.subr.bf16.mxu0 0
        %1035 = vmatpush1.bf16.msra.mxu0 0
        %1036 = vmatprep.subr.bf16.mxu0 0
        %1037 = vmatpush1.bf16.msra.mxu0 0
        %1038 = vmatprep.subr.bf16.mxu0 0
        %1039 = vmatpush1.bf16.msra.mxu0 %v1021
        %1040 = vmatprep.subr.bf16.mxu0 0
        %1041 = vmatpush1.bf16.msra.mxu0 %v1020
        %1042 = vmatprep.subr.bf16.mxu0 0
        %1043 = vmatpush1.bf16.msra.mxu0 %v1019
        %1044 = vmatprep.subr.bf16.mxu0 0
        %1045 = vmatpush1.bf16.msra.mxu0 %v1018
        %1046 = vmatprep.subr.bf16.mxu0 0
        %1047 = vmatpush2.bf16.msra.mxu0 0
        %1048 = vmatprep.subr.bf16.mxu0 0
        %1049 = vmatpush2.bf16.msra.mxu0 0
        %1050 = vmatprep.subr.bf16.mxu0 0
        %1051 = vmatpush2.bf16.msra.mxu0 0
        %1052 = vmatprep.subr.bf16.mxu0 0
        %1053 = vmatpush2.bf16.msra.mxu0 0
        %1054 = vmatprep.subr.bf16.mxu0 0
        %1055 = vmatpush2.bf16.msra.mxu0 0
        %1056 = vmatprep.subr.bf16.mxu0 0
        %1057 = vmatpush2.bf16.msra.mxu0 0
        %1058 = vmatprep.subr.bf16.mxu0 0
        %1059 = vmatpush2.bf16.msra.mxu0 0
        %1060 = vmatprep.subr.bf16.mxu0 0
        %1061 = vmatpush2.bf16.msra.mxu0 0
        %1062 = vmatprep.mubr.bf16.mxu0 0
        %1063 = vmatmul.mubr.bf16.gmra.mxu0 %v1026
        %v1064 = vpop.f32.mrf.mxu0
        %v1065 = vadd.f32 %v650, %v1064
        %v1066 = vpop.f32.mrf.mxu0
        %v1067 = vpop.f32.mrf.mxu0
        %v1068 = vadd.f32 %v650, %v1067
        %v1069 = vpop.f32.mrf.mxu0
        %1070 = vmatprep.mubr.bf16.mxu0 0
        %1071 = vmatmul.mubr.bf16.gmra.mxu0 %v1028
        %v1072 = vpop.f32.mrf.mxu0
        %v1073 = vadd.f32 %v650, %v1072
        %v1074 = vpop.f32.mrf.mxu0
        %v1075 = vpop.f32.mrf.mxu0
        %v1076 = vadd.f32 %v650, %v1075
        %v1077 = vpop.f32.mrf.mxu0
        %1078 = vdwg.mxu0
        %v1079 = vxor.u32 %v1065, 2147483648
        %v1080 = vxor.u32 %v1068, 2147483648
        %v1081 = vxor.u32 %v1073, 2147483648
        %v1082 = vxor.u32 %v1076, 2147483648
        %v1083 = vmul.f32 %v1079, 1.442695
        %v1084 = vpow.pop %v1083
        %v1085 = vmul.f32 %v1080, 1.442695
        %v1086 = vpow.pop %v1085
        %v1087 = vmul.f32 %v1081, 1.442695
        %v1088 = vpow.pop %v1087
        %v1089 = vmul.f32 %v1082, 1.442695
        %v1090 = vpow.pop %v1089
        %v1091 = vadd.f32 %v1084, 1.0
        %v1092 = vadd.f32 %v1086, 1.0
        %v1093 = vadd.f32 %v1088, 1.0
        %v1094 = vadd.f32 %v1090, 1.0
        %v1095 = vrcp.pop %v1091
        %v1096 = vmul.f32 1.0, %v1095
        %v1097 = vrcp.pop %v1092
        %v1098 = vmul.f32 1.0, %v1097
        %v1099 = vrcp.pop %v1093
        %v1100 = vmul.f32 1.0, %v1099
        %v1101 = vrcp.pop %v1094
        %v1102 = vmul.f32 1.0, %v1101
        %1107 = vrot.lane.b32.xlu0 %v1065, 32
        %v1108 = vpop.permute.xlu0 %1107
        %1109 = vrot.lane.b32.xlu0 %v1068, 32
        %v1110 = vpop.permute.xlu0 %1109
        %1111 = vrot.lane.b32.xlu0 %v1073, 32
        %v1112 = vpop.permute.xlu0 %1111
        %1113 = vrot.lane.b32.xlu0 %v1076, 32
        %v1114 = vpop.permute.xlu0 %1113
        %v1119 = vmul.f32 %v1096, %v1108
        %v1120 = vmul.f32 %v1098, %v1110
        %v1121 = vmul.f32 %v1100, %v1112
        %v1122 = vmul.f32 %v1102, %v1114
        %1127 = vrot.lane.b32.xlu0 %v1119, 64
        %v1128 = vpop.permute.xlu0 %1127
        %1129 = vrot.lane.b32.xlu0 %v1120, 64
        %v1130 = vpop.permute.xlu0 %1129
        %1131 = vrot.lane.b32.xlu0 %v1121, 64
        %v1132 = vpop.permute.xlu0 %1131
        %1133 = vrot.lane.b32.xlu0 %v1122, 64
        %v1134 = vpop.permute.xlu0 %1133
        %v1139 = vadd.f32 %v1065, %v1128
        %v1140 = vadd.f32 %v1068, %v1130
        %v1141 = vadd.f32 %v1073, %v1132
        %v1142 = vadd.f32 %v1076, %v1134
        %v1143 = vtanh.pop %v1139
        %v1144 = vtanh.pop %v1140
        %v1145 = vtanh.pop %v1141
        %v1146 = vtanh.pop %v1142
        %v1147 = vsub.f32 1.0, %v1096
        %v1148 = vsub.f32 1.0, %v1098
        %v1149 = vsub.f32 1.0, %v1100
        %v1150 = vsub.f32 1.0, %v1102
        %1155 = vrot.lane.b32.xlu0 %v1143, 96
        %v1156 = vpop.permute.xlu0 %1155
        %1157 = vrot.lane.b32.xlu0 %v1144, 96
        %v1158 = vpop.permute.xlu0 %1157
        %1159 = vrot.lane.b32.xlu0 %v1145, 96
        %v1160 = vpop.permute.xlu0 %1159
        %1161 = vrot.lane.b32.xlu0 %v1146, 96
        %v1162 = vpop.permute.xlu0 %1161
        %v1167 = vmul.f32 %v1147, %v1156
        %v1168 = vmul.f32 %v1148, %v1158
        %v1169 = vmul.f32 %v1149, %v1160
        %v1170 = vmul.f32 %v1150, %v1162
        %v1171 = vmul.f32 %v1096, %v922
        %v1172 = vmul.f32 %v1098, %v923
        %v1173 = vmul.f32 %v1100, %v924
        %v1174 = vmul.f32 %v1102, %v925
        %v1175 = vadd.f32 %v1167, %v1171
        %v1176 = vadd.f32 %v1168, %v1172
        %v1177 = vadd.f32 %v1169, %v1173
        %v1178 = vadd.f32 %v1170, %v1174
        %v1179 = vpack.c.bf16 %v1176, %v1175
        %v1180 = vpack.c.bf16 %v1178, %v1177
        %1183 = vrot.lane.b32.xlu0 %v1179, 96
        %v1184 = vpop.permute.xlu0 %1183
        %1185 = vrot.lane.b32.xlu0 %v1180, 96
        %v1186 = vpop.permute.xlu0 %1185
        %1189 = vmatprep.subr.bf16.mxu0 0
        %1190 = vmatpush1.bf16.msra.mxu0 0
        %1191 = vmatprep.subr.bf16.mxu0 0
        %1192 = vmatpush1.bf16.msra.mxu0 0
        %1193 = vmatprep.subr.bf16.mxu0 0
        %1194 = vmatpush1.bf16.msra.mxu0 0
        %1195 = vmatprep.subr.bf16.mxu0 0
        %1196 = vmatpush1.bf16.msra.mxu0 0
        %1197 = vmatprep.subr.bf16.mxu0 0
        %1198 = vmatpush1.bf16.msra.mxu0 0
        %1199 = vmatprep.subr.bf16.mxu0 0
        %1200 = vmatpush1.bf16.msra.mxu0 0
        %1201 = vmatprep.subr.bf16.mxu0 0
        %1202 = vmatpush1.bf16.msra.mxu0 %v1186
        %1203 = vmatprep.subr.bf16.mxu0 0
        %1204 = vmatpush1.bf16.msra.mxu0 %v1184
        %1205 = vmatprep.subr.bf16.mxu0 0
        %1206 = vmatpush2.bf16.msra.mxu0 0
        %1207 = vmatprep.subr.bf16.mxu0 0
        %1208 = vmatpush2.bf16.msra.mxu0 0
        %1209 = vmatprep.subr.bf16.mxu0 0
        %1210 = vmatpush2.bf16.msra.mxu0 0
        %1211 = vmatprep.subr.bf16.mxu0 0
        %1212 = vmatpush2.bf16.msra.mxu0 0
        %1213 = vmatprep.subr.bf16.mxu0 0
        %1214 = vmatpush2.bf16.msra.mxu0 0
        %1215 = vmatprep.subr.bf16.mxu0 0
        %1216 = vmatpush2.bf16.msra.mxu0 0
        %1217 = vmatprep.subr.bf16.mxu0 0
        %1218 = vmatpush2.bf16.msra.mxu0 0
        %1219 = vmatprep.subr.bf16.mxu0 0
        %1220 = vmatpush2.bf16.msra.mxu0 0
        %1221 = vmatprep.mubr.bf16.mxu0 0
        %1222 = vmatmul.mubr.bf16.gmra.mxu0 %v656
        %v1223 = vpop.f32.mrf.mxu0
        %v1224 = vadd.f32 0.0, %v1223
        %v1225 = vpop.f32.mrf.mxu0
        %v1226 = vpop.f32.mrf.mxu0
        %v1227 = vadd.f32 0.0, %v1226
        %v1228 = vpop.f32.mrf.mxu0
        %1229 = vmatprep.mubr.bf16.mxu0 0
        %1230 = vmatmul.mubr.bf16.gmra.mxu0 %v659
        %v1231 = vpop.f32.mrf.mxu0
        %v1232 = vadd.f32 0.0, %v1231
        %v1233 = vpop.f32.mrf.mxu0
        %v1234 = vpop.f32.mrf.mxu0
        %v1235 = vadd.f32 0.0, %v1234
        %v1236 = vpop.f32.mrf.mxu0
        %1237 = vdwg.mxu0
        %v1238 = vpack.c.bf16 %v1227, %v1224
        %v1239 = vpack.c.bf16 %v1235, %v1232
        %v1242 = vsel %vm654, %v1238, %v1179
        %v1245 = vsel %vm654, %v1239, %v1180
        %s1246 = scalar_lea.vmem [#allocation6], 64
        %v1247 = vld [vmem:[%s1246] sm:$0xf]
        %v1248 = vld [vmem:[%s1246 + $0x4] sm:$0xf]
        %v1249 = vld [vmem:[%s1246 + $0x8] sm:$0xf]
        %v1250 = vld [vmem:[%s1246 + $0xc] sm:$0xf]
        %v1251 = vld [vmem:[%s1246 + $0x10] sm:$0xf]
        %v1252 = vld [vmem:[%s1246 + $0x14] sm:$0xf]
        %v1253 = vld [vmem:[%s1246 + $0x18] sm:$0xf]
        %v1254 = vld [vmem:[%s1246 + $0x1c] sm:$0xf]
        %v1263 = vunpack.c.l.b16 %v1247
        %v1264 = vunpack.c.l.b16 %v1248
        %v1265 = vunpack.c.l.b16 %v1249
        %v1266 = vunpack.c.l.b16 %v1250
        %v1267 = vunpack.c.l.b16 %v1251
        %v1268 = vunpack.c.l.b16 %v1252
        %v1269 = vunpack.c.l.b16 %v1253
        %v1270 = vunpack.c.l.b16 %v1254
        %v1271 = vpack.c.b16 %v1264, %v1263
        %v1272 = vpack.c.b16 %v1266, %v1265
        %v1273 = vpack.c.b16 %v1268, %v1267
        %v1274 = vpack.c.b16 %v1270, %v1269
        %v1279 = vsel %vm756, %v1242, 0
        %v1281 = vsel %vm756, %v1245, 0
        %1283 = vmatprep.subr.bf16.mxu0 0
        %1284 = vmatpush1.bf16.msra.mxu0 0
        %1285 = vmatprep.subr.bf16.mxu0 0
        %1286 = vmatpush1.bf16.msra.mxu0 0
        %1287 = vmatprep.subr.bf16.mxu0 0
        %1288 = vmatpush1.bf16.msra.mxu0 0
        %1289 = vmatprep.subr.bf16.mxu0 0
        %1290 = vmatpush1.bf16.msra.mxu0 0
        %1291 = vmatprep.subr.bf16.mxu0 0
        %1292 = vmatpush1.bf16.msra.mxu0 %v1274
        %1293 = vmatprep.subr.bf16.mxu0 0
        %1294 = vmatpush1.bf16.msra.mxu0 %v1273
        %1295 = vmatprep.subr.bf16.mxu0 0
        %1296 = vmatpush1.bf16.msra.mxu0 %v1272
        %1297 = vmatprep.subr.bf16.mxu0 0
        %1298 = vmatpush1.bf16.msra.mxu0 %v1271
        %1299 = vmatprep.subr.bf16.mxu0 0
        %1300 = vmatpush2.bf16.msra.mxu0 0
        %1301 = vmatprep.subr.bf16.mxu0 0
        %1302 = vmatpush2.bf16.msra.mxu0 0
        %1303 = vmatprep.subr.bf16.mxu0 0
        %1304 = vmatpush2.bf16.msra.mxu0 0
        %1305 = vmatprep.subr.bf16.mxu0 0
        %1306 = vmatpush2.bf16.msra.mxu0 0
        %1307 = vmatprep.subr.bf16.mxu0 0
        %1308 = vmatpush2.bf16.msra.mxu0 0
        %1309 = vmatprep.subr.bf16.mxu0 0
        %1310 = vmatpush2.bf16.msra.mxu0 0
        %1311 = vmatprep.subr.bf16.mxu0 0
        %1312 = vmatpush2.bf16.msra.mxu0 0
        %1313 = vmatprep.subr.bf16.mxu0 0
        %1314 = vmatpush2.bf16.msra.mxu0 0
        %1315 = vmatprep.mubr.bf16.mxu0 0
        %1316 = vmatmul.mubr.bf16.gmra.mxu0 %v1279
        %v1317 = vpop.f32.mrf.mxu0
        %v1318 = vadd.f32 %v650, %v1317
        %v1319 = vpop.f32.mrf.mxu0
        %v1320 = vpop.f32.mrf.mxu0
        %v1321 = vadd.f32 %v650, %v1320
        %v1322 = vpop.f32.mrf.mxu0
        %1323 = vmatprep.mubr.bf16.mxu0 0
        %1324 = vmatmul.mubr.bf16.gmra.mxu0 %v1281
        %v1325 = vpop.f32.mrf.mxu0
        %v1326 = vadd.f32 %v650, %v1325
        %v1327 = vpop.f32.mrf.mxu0
        %v1328 = vpop.f32.mrf.mxu0
        %v1329 = vadd.f32 %v650, %v1328
        %v1330 = vpop.f32.mrf.mxu0
        %1331 = vdwg.mxu0
        %v1332 = vxor.u32 %v1318, 2147483648
        %v1333 = vxor.u32 %v1321, 2147483648
        %v1334 = vxor.u32 %v1326, 2147483648
        %v1335 = vxor.u32 %v1329, 2147483648
        %v1336 = vmul.f32 %v1332, 1.442695
        %v1337 = vpow.pop %v1336
        %v1338 = vmul.f32 %v1333, 1.442695
        %v1339 = vpow.pop %v1338
        %v1340 = vmul.f32 %v1334, 1.442695
        %v1341 = vpow.pop %v1340
        %v1342 = vmul.f32 %v1335, 1.442695
        %v1343 = vpow.pop %v1342
        %v1344 = vadd.f32 %v1337, 1.0
        %v1345 = vadd.f32 %v1339, 1.0
        %v1346 = vadd.f32 %v1341, 1.0
        %v1347 = vadd.f32 %v1343, 1.0
        %v1348 = vrcp.pop %v1344
        %v1349 = vmul.f32 1.0, %v1348
        %v1350 = vrcp.pop %v1345
        %v1351 = vmul.f32 1.0, %v1350
        %v1352 = vrcp.pop %v1346
        %v1353 = vmul.f32 1.0, %v1352
        %v1354 = vrcp.pop %v1347
        %v1355 = vmul.f32 1.0, %v1354
        %1360 = vrot.lane.b32.xlu0 %v1318, 32
        %v1361 = vpop.permute.xlu0 %1360
        %1362 = vrot.lane.b32.xlu0 %v1321, 32
        %v1363 = vpop.permute.xlu0 %1362
        %1364 = vrot.lane.b32.xlu0 %v1326, 32
        %v1365 = vpop.permute.xlu0 %1364
        %1366 = vrot.lane.b32.xlu0 %v1329, 32
        %v1367 = vpop.permute.xlu0 %1366
        %v1372 = vmul.f32 %v1349, %v1361
        %v1373 = vmul.f32 %v1351, %v1363
        %v1374 = vmul.f32 %v1353, %v1365
        %v1375 = vmul.f32 %v1355, %v1367
        %1380 = vrot.lane.b32.xlu0 %v1372, 64
        %v1381 = vpop.permute.xlu0 %1380
        %1382 = vrot.lane.b32.xlu0 %v1373, 64
        %v1383 = vpop.permute.xlu0 %1382
        %1384 = vrot.lane.b32.xlu0 %v1374, 64
        %v1385 = vpop.permute.xlu0 %1384
        %1386 = vrot.lane.b32.xlu0 %v1375, 64
        %v1387 = vpop.permute.xlu0 %1386
        %v1392 = vadd.f32 %v1318, %v1381
        %v1393 = vadd.f32 %v1321, %v1383
        %v1394 = vadd.f32 %v1326, %v1385
        %v1395 = vadd.f32 %v1329, %v1387
        %v1396 = vtanh.pop %v1392
        %v1397 = vtanh.pop %v1393
        %v1398 = vtanh.pop %v1394
        %v1399 = vtanh.pop %v1395
        %v1400 = vsub.f32 1.0, %v1349
        %v1401 = vsub.f32 1.0, %v1351
        %v1402 = vsub.f32 1.0, %v1353
        %v1403 = vsub.f32 1.0, %v1355
        %1408 = vrot.lane.b32.xlu0 %v1396, 96
        %v1409 = vpop.permute.xlu0 %1408
        %1410 = vrot.lane.b32.xlu0 %v1397, 96
        %v1411 = vpop.permute.xlu0 %1410
        %1412 = vrot.lane.b32.xlu0 %v1398, 96
        %v1413 = vpop.permute.xlu0 %1412
        %1414 = vrot.lane.b32.xlu0 %v1399, 96
        %v1415 = vpop.permute.xlu0 %1414
        %v1420 = vmul.f32 %v1400, %v1409
        %v1421 = vmul.f32 %v1401, %v1411
        %v1422 = vmul.f32 %v1402, %v1413
        %v1423 = vmul.f32 %v1403, %v1415
        %v1424 = vmul.f32 %v1349, %v1175
        %v1425 = vmul.f32 %v1351, %v1176
        %v1426 = vmul.f32 %v1353, %v1177
        %v1427 = vmul.f32 %v1355, %v1178
        %v1428 = vadd.f32 %v1420, %v1424
        %v1429 = vadd.f32 %v1421, %v1425
        %v1430 = vadd.f32 %v1422, %v1426
        %v1431 = vadd.f32 %v1423, %v1427
        %v1432 = vpack.c.bf16 %v1429, %v1428
        %v1433 = vpack.c.bf16 %v1431, %v1430
        %v1434 = vld [vmem:[#allocation9] sm:$0xf]
        %v1435 = vld [vmem:[#allocation9 + $0x4] sm:$0xf]
        %v1436 = vld [vmem:[#allocation9 + $0x8] sm:$0xf]
        %v1437 = vld [vmem:[#allocation9 + $0xc] sm:$0xf]
        %v1438 = vld [vmem:[#allocation10] sm:$0x1]
        %v1440 = vlaneseq
        %v1441 = vshrl.u32 %v1440, 7
        %v1442 = vsub.s32 0, %v1441
        %v1443 = vrot.slane %v1438, %v1442
        %1447 = vrot.lane.b32.xlu0 %v1432, 96
        %v1448 = vpop.permute.xlu0 %1447
        %1449 = vrot.lane.b32.xlu0 %v1433, 96
        %v1450 = vpop.permute.xlu0 %1449
        %v1455 = vunpack.c.l.b16 %v1434
        %v1456 = vunpack.c.l.b16 %v1435
        %v1457 = vunpack.c.l.b16 %v1436
        %v1458 = vunpack.c.l.b16 %v1437
        %v1459 = vpack.c.b16 %v1456, %v1455
        %v1460 = vpack.c.b16 %v1458, %v1457
        %v1464 = vsel %vm654, %v1448, 0
        %v1467 = vsel %vm654, %v1450, 0
        %1469 = vmatprep.subr.bf16.mxu0 0
        %1470 = vmatpush1.bf16.msra.mxu0 0
        %1471 = vmatprep.subr.bf16.mxu0 0
        %1472 = vmatpush1.bf16.msra.mxu0 0
        %1473 = vmatprep.subr.bf16.mxu0 0
        %1474 = vmatpush1.bf16.msra.mxu0 0
        %1475 = vmatprep.subr.bf16.mxu0 0
        %1476 = vmatpush1.bf16.msra.mxu0 0
        %1477 = vmatprep.subr.bf16.mxu0 0
        %1478 = vmatpush1.bf16.msra.mxu0 0
        %1479 = vmatprep.subr.bf16.mxu0 0
        %1480 = vmatpush1.bf16.msra.mxu0 0
        %1481 = vmatprep.subr.bf16.mxu0 0
        %1482 = vmatpush1.bf16.msra.mxu0 %v1460
        %1483 = vmatprep.subr.bf16.mxu0 0
        %1484 = vmatpush1.bf16.msra.mxu0 %v1459
        %1485 = vmatprep.subr.bf16.mxu0 0
        %1486 = vmatpush2.bf16.msra.mxu0 0
        %1487 = vmatprep.subr.bf16.mxu0 0
        %1488 = vmatpush2.bf16.msra.mxu0 0
        %1489 = vmatprep.subr.bf16.mxu0 0
        %1490 = vmatpush2.bf16.msra.mxu0 0
        %1491 = vmatprep.subr.bf16.mxu0 0
        %1492 = vmatpush2.bf16.msra.mxu0 0
        %1493 = vmatprep.subr.bf16.mxu0 0
        %1494 = vmatpush2.bf16.msra.mxu0 0
        %1495 = vmatprep.subr.bf16.mxu0 0
        %1496 = vmatpush2.bf16.msra.mxu0 0
        %1497 = vmatprep.subr.bf16.mxu0 0
        %1498 = vmatpush2.bf16.msra.mxu0 0
        %1499 = vmatprep.subr.bf16.mxu0 0
        %1500 = vmatpush2.bf16.msra.mxu0 0
        %1501 = vmatprep.mubr.bf16.mxu0 0
        %1502 = vmatmul.mubr.bf16.gmra.mxu0 %v1464
        %v1503 = vpop.f32.mrf.mxu0
        %v1504 = vadd.f32 %v1443, %v1503
        %v1505 = vpop.f32.mrf.mxu0
        %v1506 = vpop.f32.mrf.mxu0
        %v1507 = vadd.f32 %v1443, %v1506
        %v1508 = vpop.f32.mrf.mxu0
        %1509 = vmatprep.mubr.bf16.mxu0 0
        %1510 = vmatmul.mubr.bf16.gmra.mxu0 %v1467
        %v1511 = vpop.f32.mrf.mxu0
        %v1512 = vadd.f32 %v1443, %v1511
        %v1513 = vpop.f32.mrf.mxu0
        %v1514 = vpop.f32.mrf.mxu0
        %v1515 = vadd.f32 %v1443, %v1514
        %v1516 = vpop.f32.mrf.mxu0
        %1517 = vdwg.mxu0
        %v1518 = vtanh.pop %v1504
        %v1519 = vtanh.pop %v1507
        %v1520 = vtanh.pop %v1512
        %v1521 = vtanh.pop %v1515
        %v1522 = vpack.c.bf16 %v1519, %v1518
        %v1523 = vpack.c.bf16 %v1521, %v1520
        %v1524 = vld [vmem:[#allocation12] sm:$0xf]
        %v1525 = vld [vmem:[#allocation12 + $0x4] sm:$0xf]
        %v1526 = vld [vmem:[#allocation12 + $0x8] sm:$0xf]
        %v1527 = vld [vmem:[#allocation12 + $0xc] sm:$0xf]
        %v1528 = vld [vmem:[#allocation13] sm:$0x1]
        %v1530 = vlaneseq
        %v1531 = vshrl.u32 %v1530, 7
        %v1532 = vsub.s32 0, %v1531
        %v1533 = vrot.slane %v1528, %v1532
        %v1539 = vunpack.c.l.b16 %v1524
        %v1540 = vunpack.c.l.b16 %v1525
        %v1541 = vunpack.c.l.b16 %v1526
        %v1542 = vunpack.c.l.b16 %v1527
        %v1543 = vpack.c.b16 %v1540, %v1539
        %v1544 = vpack.c.b16 %v1542, %v1541
        %v1548 = vsel %vm654, %v1522, 0
        %v1551 = vsel %vm654, %v1523, 0
        %1553 = vmatprep.subr.bf16.mxu0 0
        %1554 = vmatpush1.bf16.msra.mxu0 0
        %1555 = vmatprep.subr.bf16.mxu0 0
        %1556 = vmatpush1.bf16.msra.mxu0 0
        %1557 = vmatprep.subr.bf16.mxu0 0
        %1558 = vmatpush1.bf16.msra.mxu0 0
        %1559 = vmatprep.subr.bf16.mxu0 0
        %1560 = vmatpush1.bf16.msra.mxu0 0
        %1561 = vmatprep.subr.bf16.mxu0 0
        %1562 = vmatpush1.bf16.msra.mxu0 0
        %1563 = vmatprep.subr.bf16.mxu0 0
        %1564 = vmatpush1.bf16.msra.mxu0 0
        %1565 = vmatprep.subr.bf16.mxu0 0
        %1566 = vmatpush1.bf16.msra.mxu0 %v1544
        %1567 = vmatprep.subr.bf16.mxu0 0
        %1568 = vmatpush1.bf16.msra.mxu0 %v1543
        %1569 = vmatprep.subr.bf16.mxu0 0
        %1570 = vmatpush2.bf16.msra.mxu0 0
        %1571 = vmatprep.subr.bf16.mxu0 0
        %1572 = vmatpush2.bf16.msra.mxu0 0
        %1573 = vmatprep.subr.bf16.mxu0 0
        %1574 = vmatpush2.bf16.msra.mxu0 0
        %1575 = vmatprep.subr.bf16.mxu0 0
        %1576 = vmatpush2.bf16.msra.mxu0 0
        %1577 = vmatprep.subr.bf16.mxu0 0
        %1578 = vmatpush2.bf16.msra.mxu0 0
        %1579 = vmatprep.subr.bf16.mxu0 0
        %1580 = vmatpush2.bf16.msra.mxu0 0
        %1581 = vmatprep.subr.bf16.mxu0 0
        %1582 = vmatpush2.bf16.msra.mxu0 0
        %1583 = vmatprep.subr.bf16.mxu0 0
        %1584 = vmatpush2.bf16.msra.mxu0 0
        %1585 = vmatprep.mubr.bf16.mxu0 0
        %1586 = vmatmul.mubr.bf16.gmra.mxu0 %v1548
        %v1587 = vpop.f32.mrf.mxu0
        %v1588 = vadd.f32 %v1533, %v1587
        %v1589 = vpop.f32.mrf.mxu0
        %v1590 = vpop.f32.mrf.mxu0
        %v1591 = vadd.f32 %v1533, %v1590
        %v1592 = vpop.f32.mrf.mxu0
        %1593 = vmatprep.mubr.bf16.mxu0 0
        %1594 = vmatmul.mubr.bf16.gmra.mxu0 %v1551
        %v1595 = vpop.f32.mrf.mxu0
        %v1596 = vadd.f32 %v1533, %v1595
        %v1597 = vpop.f32.mrf.mxu0
        %v1598 = vpop.f32.mrf.mxu0
        %v1599 = vadd.f32 %v1533, %v1598
        %v1600 = vpop.f32.mrf.mxu0
        %1601 = vdwg.mxu0
        %v1602 = vtanh.pop %v1588
        %v1603 = vtanh.pop %v1591
        %v1604 = vtanh.pop %v1596
        %v1605 = vtanh.pop %v1599
        %v1606 = vpack.c.bf16 %v1603, %v1602
        %v1607 = vpack.c.bf16 %v1605, %v1604
        %v1608 = vld [vmem:[%s8] sm:$0xf]
        %v1609 = vld [vmem:[%s8 + $0x4] sm:$0xf]
        %v1610 = vld [vmem:[%s8 + $0x8] sm:$0xf]
        %v1611 = vld [vmem:[%s8 + $0xc] sm:$0xf]
        %v1612 = vld [vmem:[#allocation15] sm:$0x1]
        %v1614 = vlaneseq
        %v1615 = vshrl.u32 %v1614, 7
        %v1616 = vsub.s32 0, %v1615
        %v1617 = vrot.slane %v1612, %v1616
        %v1623 = vunpack.c.l.b16 %v1608
        %v1624 = vunpack.c.l.b16 %v1609
        %v1625 = vunpack.c.l.b16 %v1610
        %v1626 = vunpack.c.l.b16 %v1611
        %v1627 = vpack.c.b16 %v1624, %v1623
        %v1628 = vpack.c.b16 %v1626, %v1625
        %v1632 = vsel %vm654, %v1606, 0
        %v1635 = vsel %vm654, %v1607, 0
        %1637 = vmatprep.subr.bf16.mxu0 0
        %1638 = vmatpush1.bf16.msra.mxu0 0
        %1639 = vmatprep.subr.bf16.mxu0 0
        %1640 = vmatpush1.bf16.msra.mxu0 0
        %1641 = vmatprep.subr.bf16.mxu0 0
        %1642 = vmatpush1.bf16.msra.mxu0 0
        %1643 = vmatprep.subr.bf16.mxu0 0
        %1644 = vmatpush1.bf16.msra.mxu0 0
        %1645 = vmatprep.subr.bf16.mxu0 0
        %1646 = vmatpush1.bf16.msra.mxu0 0
        %1647 = vmatprep.subr.bf16.mxu0 0
        %1648 = vmatpush1.bf16.msra.mxu0 0
        %1649 = vmatprep.subr.bf16.mxu0 0
        %1650 = vmatpush1.bf16.msra.mxu0 %v1628
        %1651 = vmatprep.subr.bf16.mxu0 0
        %1652 = vmatpush1.bf16.msra.mxu0 %v1627
        %1653 = vmatprep.subr.bf16.mxu0 0
        %1654 = vmatpush2.bf16.msra.mxu0 0
        %1655 = vmatprep.subr.bf16.mxu0 0
        %1656 = vmatpush2.bf16.msra.mxu0 0
        %1657 = vmatprep.subr.bf16.mxu0 0
        %1658 = vmatpush2.bf16.msra.mxu0 0
        %1659 = vmatprep.subr.bf16.mxu0 0
        %1660 = vmatpush2.bf16.msra.mxu0 0
        %1661 = vmatprep.subr.bf16.mxu0 0
        %1662 = vmatpush2.bf16.msra.mxu0 0
        %1663 = vmatprep.subr.bf16.mxu0 0
        %1664 = vmatpush2.bf16.msra.mxu0 0
        %1665 = vmatprep.subr.bf16.mxu0 0
        %1666 = vmatpush2.bf16.msra.mxu0 0
        %1667 = vmatprep.subr.bf16.mxu0 0
        %1668 = vmatpush2.bf16.msra.mxu0 0
        %1669 = vmatprep.mubr.bf16.mxu0 0
        %1670 = vmatmul.mubr.bf16.gmra.mxu0 %v1632
        %v1671 = vpop.f32.mrf.mxu0
        %v1672 = vadd.f32 %v1617, %v1671
        %v1673 = vpop.f32.mrf.mxu0
        %v1674 = vpop.f32.mrf.mxu0
        %v1675 = vadd.f32 %v1617, %v1674
        %v1676 = vpop.f32.mrf.mxu0
        %1677 = vmatprep.mubr.bf16.mxu0 0
        %1678 = vmatmul.mubr.bf16.gmra.mxu0 %v1635
        %v1679 = vpop.f32.mrf.mxu0
        %v1680 = vadd.f32 %v1617, %v1679
        %v1681 = vpop.f32.mrf.mxu0
        %v1682 = vpop.f32.mrf.mxu0
        %v1683 = vadd.f32 %v1617, %v1682
        %v1684 = vpop.f32.mrf.mxu0
        %1685 = vdwg.mxu0
        %v1686 = vtanh.pop %v1672
        %v1687 = vtanh.pop %v1675
        %v1688 = vtanh.pop %v1680
        %v1689 = vtanh.pop %v1683
        %v1690 = vpack.c.bf16 %v1687, %v1686
        %v1691 = vpack.c.bf16 %v1689, %v1688
        %v1692 = vld [vmem:[#allocation16] sm:$0xf]
        %v1693 = vld [vmem:[#allocation16 + $0x4] sm:$0xf]
        %v1694 = vld [vmem:[#allocation16 + $0x8] sm:$0xf]
        %v1695 = vld [vmem:[#allocation16 + $0xc] sm:$0xf]
        %v1696 = vld [vmem:[#allocation18] sm:$0x1]
        %v1698 = vlaneseq
        %v1699 = vshrl.u32 %v1698, 7
        %v1700 = vsub.s32 0, %v1699
        %v1701 = vrot.slane %v1696, %v1700
        %v1707 = vunpack.c.l.b16 %v1692
        %v1708 = vunpack.c.l.b16 %v1693
        %v1709 = vunpack.c.l.b16 %v1694
        %v1710 = vunpack.c.l.b16 %v1695
        %v1711 = vpack.c.b16 %v1708, %v1707
        %v1712 = vpack.c.b16 %v1710, %v1709
        %v1716 = vsel %vm654, %v1690, 0
        %v1719 = vsel %vm654, %v1691, 0
        %1721 = vmatprep.subr.bf16.mxu0 0
        %1722 = vmatpush1.bf16.msra.mxu0 0
        %1723 = vmatprep.subr.bf16.mxu0 0
        %1724 = vmatpush1.bf16.msra.mxu0 0
        %1725 = vmatprep.subr.bf16.mxu0 0
        %1726 = vmatpush1.bf16.msra.mxu0 0
        %1727 = vmatprep.subr.bf16.mxu0 0
        %1728 = vmatpush1.bf16.msra.mxu0 0
        %1729 = vmatprep.subr.bf16.mxu0 0
        %1730 = vmatpush1.bf16.msra.mxu0 0
        %1731 = vmatprep.subr.bf16.mxu0 0
        %1732 = vmatpush1.bf16.msra.mxu0 0
        %1733 = vmatprep.subr.bf16.mxu0 0
        %1734 = vmatpush1.bf16.msra.mxu0 %v1712
        %1735 = vmatprep.subr.bf16.mxu0 0
        %1736 = vmatpush1.bf16.msra.mxu0 %v1711
        %1737 = vmatprep.subr.bf16.mxu0 0
        %1738 = vmatpush2.bf16.msra.mxu0 0
        %1739 = vmatprep.subr.bf16.mxu0 0
        %1740 = vmatpush2.bf16.msra.mxu0 0
        %1741 = vmatprep.subr.bf16.mxu0 0
        %1742 = vmatpush2.bf16.msra.mxu0 0
        %1743 = vmatprep.subr.bf16.mxu0 0
        %1744 = vmatpush2.bf16.msra.mxu0 0
        %1745 = vmatprep.subr.bf16.mxu0 0
        %1746 = vmatpush2.bf16.msra.mxu0 0
        %1747 = vmatprep.subr.bf16.mxu0 0
        %1748 = vmatpush2.bf16.msra.mxu0 0
        %1749 = vmatprep.subr.bf16.mxu0 0
        %1750 = vmatpush2.bf16.msra.mxu0 0
        %1751 = vmatprep.subr.bf16.mxu0 0
        %1752 = vmatpush2.bf16.msra.mxu0 0
        %1753 = vmatprep.mubr.bf16.mxu0 0
        %1754 = vmatmul.mubr.bf16.gmra.mxu0 %v1716
        %v1755 = vpop.f32.mrf.mxu0
        %v1756 = vadd.f32 %v1701, %v1755
        %v1757 = vpop.f32.mrf.mxu0
        %v1758 = vpop.f32.mrf.mxu0
        %v1759 = vadd.f32 %v1701, %v1758
        %v1760 = vpop.f32.mrf.mxu0
        %1761 = vmatprep.mubr.bf16.mxu0 0
        %1762 = vmatmul.mubr.bf16.gmra.mxu0 %v1719
        %v1763 = vpop.f32.mrf.mxu0
        %v1764 = vadd.f32 %v1701, %v1763
        %v1765 = vpop.f32.mrf.mxu0
        %v1766 = vpop.f32.mrf.mxu0
        %v1767 = vadd.f32 %v1701, %v1766
        %v1768 = vpop.f32.mrf.mxu0
        %1769 = vdwg.mxu0
        %1770 = vst [vmem:[%s628] sm:$0xff] %v1756
        %1771 = vst [vmem:[%s628 + $0x8] sm:$0xff] %v1759
        %1772 = vst [vmem:[%s628 + $0x10] sm:$0xff] %v1764
        %1773 = vst [vmem:[%s628 + $0x18] sm:$0xff] %v1767
        %1774 = vmax.xlane.f32.xlu0 %v1756
        %v1775 = vpop.xlane.xlu0 %1774
        %1776 = vmax.xlane.f32.xlu0 %v1759
        %v1777 = vpop.xlane.xlu0 %1776
        %1778 = vmax.xlane.f32.xlu0 %v1764
        %v1779 = vpop.xlane.xlu0 %1778
        %1780 = vmax.xlane.f32.xlu0 %v1767
        %v1781 = vpop.xlane.xlu0 %1780
        %v1782 = vsub.f32 %v1756, %v1775
        %v1783 = vsub.f32 %v1759, %v1777
        %v1784 = vsub.f32 %v1764, %v1779
        %v1785 = vsub.f32 %v1767, %v1781
        %v1786 = vmul.f32 %v1782, 1.442695
        %v1787 = vpow.pop %v1786
        %v1788 = vmul.f32 %v1783, 1.442695
        %v1789 = vpow.pop %v1788
        %v1790 = vmul.f32 %v1784, 1.442695
        %v1791 = vpow.pop %v1790
        %v1792 = vmul.f32 %v1785, 1.442695
        %v1793 = vpow.pop %v1792
        %1794 = vadd.xlane.f32.xlu0 %v1787
        %v1795 = vpop.xlane.xlu0 %1794
        %1796 = vadd.xlane.f32.xlu0 %v1789
        %v1797 = vpop.xlane.xlu0 %1796
        %1798 = vadd.xlane.f32.xlu0 %v1791
        %v1799 = vpop.xlane.xlu0 %1798
        %1800 = vadd.xlane.f32.xlu0 %v1793
        %v1801 = vpop.xlane.xlu0 %1800
        %v1802 = vlog2.pop %v1795
        %v1803 = vmul.f32 %v1802, 0.6931472
        %v1804 = vlog2.pop %v1797
        %v1805 = vmul.f32 %v1804, 0.6931472
        %v1806 = vlog2.pop %v1799
        %v1807 = vmul.f32 %v1806, 0.6931472
        %v1808 = vlog2.pop %v1801
        %v1809 = vmul.f32 %v1808, 0.6931472
        %v1810 = vsub.f32 %v1782, %v1803
        %v1811 = vsub.f32 %v1783, %v1805
        %v1812 = vsub.f32 %v1784, %v1807
        %v1813 = vsub.f32 %v1785, %v1809
        %1814 = vst [vmem:[%s633] sm:$0xff] %v1810
        %1815 = vst [vmem:[%s633 + $0x8] sm:$0xff] %v1811
        %1816 = vst [vmem:[%s633 + $0x10] sm:$0xff] %v1812
        %1817 = vst [vmem:[%s633 + $0x18] sm:$0xff] %v1813
        %p1818 = scmp.lt.s32.totalorder %s35, 7
        %s1819 = scalar_select %p1818, %s35, 7
        %s1820 = smul.addr %s1819, 4
        %s1821 = smul.addr %s1820, 8
        %s1822 = scalar_lea.vmem %s12, %s1821
        %p1823 = scmp.lt.s32.totalorder %s35, 7
        %s1824 = scalar_select %p1823, %s35, 7
        %s1825 = smul.addr %s1824, 4
        %s1826 = smul.addr %s1825, 8
        %s1827 = scalar_lea.vmem %s13, %s1826
        // Predicated region
        $region113: #{ggnn_forward.1} parent=67 // pred_check
          %p1828 = pneg %p315
        $region114: #{ggnn_forward.1} parent=67 // pred_check_branch
          %1830 = sbr.rel (%p1828) target = $region116
        $region115: #{ggnn_forward.1} parent=67 // pred_region
          _
        $region116: #{ggnn_forward.1} parent=67 // pred_fallthru
          _
        // Predicated region
        $region117: #{ggnn_forward.1} parent=67 // pred_check
          %p1831 = pneg %p341
        $region118: #{ggnn_forward.1} parent=67 // pred_check_branch
          %1833 = sbr.rel (%p1831) target = $region120
        $region119: #{ggnn_forward.1} parent=67 // pred_region
          _
        $region120: #{ggnn_forward.1} parent=67 // pred_fallthru
          _
      $region68: #{ggnn_forward.1} parent=5 // pred_fallthru
        _
      %p1834 = scmp.le.s32.totalorder 2, %s30
      // Predicated region
      $region121: #{ggnn_forward.1} parent=5 // pred_check
        %p1835 = pneg %p1834
      $region122: #{ggnn_forward.1} parent=5 // pred_check_branch
        %1837 = sbr.rel (%p1835) target = $region124
      $region123: #{ggnn_forward.1} parent=5 // pred_region
        %s1838 = ssub.s32 %s30, 2
        // Predicated region
        $region125: #{ggnn_forward.1} parent=123 // pred_check
          %p1839 = pneg %p321
        $region126: #{ggnn_forward.1} parent=123 // pred_check_branch
          %1841 = sbr.rel (%p1839) target = $region128
        $region127: #{ggnn_forward.1} parent=123 // pred_region
          %p1842 = scmp.lt.s32.totalorder %s36, 7
          %s1843 = scalar_select %p1842, %s36, 7
          %s1844 = smul.addr %s1843, 4
          %s1845 = smul.addr %s1844, 8
          %s1846 = scalar_lea.vmem %s12, %s1845
        $region128: #{ggnn_forward.1} parent=123 // pred_fallthru
          _
        // Predicated region
        $region129: #{ggnn_forward.1} parent=123 // pred_check
          %p1847 = pneg %p347
        $region130: #{ggnn_forward.1} parent=123 // pred_check_branch
          %1849 = sbr.rel (%p1847) target = $region132
        $region131: #{ggnn_forward.1} parent=123 // pred_region
          %p1850 = scmp.lt.s32.totalorder %s36, 7
          %s1851 = scalar_select %p1850, %s36, 7
          %s1852 = smul.addr %s1851, 4
          %s1853 = smul.addr %s1852, 8
          %s1854 = scalar_lea.vmem %s13, %s1853
        $region132: #{ggnn_forward.1} parent=123 // pred_fallthru
          _
      $region124: #{ggnn_forward.1} parent=5 // pred_fallthru
        _
    $region6: #{ggnn_forward.1} parent=1 // loop_footer
      %s34 = sadd.s32 1, %s30
    $region7: #{ggnn_forward.1} parent=1 // loop_footer_branch
      %29 = sbr.rel target = $region3
    $region8: #{ggnn_forward.1} parent=1 // loop_exit
      _
    %1855 = vsyncpa [#allocation3], 1
    %s1856 = scalar_lea.sflag [#allocation3], 1
    %1857 = vsyncpa %s1856, 1
    %1858 = vsyncpa [#allocation5], 1
    %s1859 = scalar_lea.sflag [#allocation5], 1
    %1860 = vsyncpa %s1859, 1
    %1861 = vsyncpa [#allocation8], 1
    %1862 = vsyncpa [#allocation11], 1
    %1863 = vsyncpa [#allocation14], 1
    %1864 = vsyncpa [#allocation17], 1

</llo_original>
